<compile_context>
chip_gen: v6e
topology: v6e:2x2x1
jax: 0.10.0
libtpu: 0.0.40
codegen_flags: <defaults>
</compile_context>

<pallas_src>
import functools

import jax
import jax.numpy as jnp
from jax import lax
from jax.experimental import pallas as pl
from jax.experimental.pallas import tpu as pltpu


HIDDEN_SIZE = 128
INPUT_SIZE = 3
NUM_LAYERS = 1      # forward only exercises a single-layer recurrence (num_layers=1)
OUTPUT_DIM = 2

_LANE = 128
_SUBLANE = 8


def _round_up(n, m):
    return ((n + m - 1) // m) * m


def _permute_gates_ifog(w):
    """Reorder the 4H gate axis (last axis) from PyTorch (i, f, g, o) to (i, f, o, g)."""
    H = w.shape[-1] // 4
    return jnp.concatenate(
        [w[..., : 2 * H], w[..., 3 * H:], w[..., 2 * H: 3 * H]], axis=-1)


def _lstm_fc_kernel(xp_ref, whh_ref, wfc_ref, bfc_ref, out_ref):
    """LSTM recurrence over all T steps + final Linear, for one batch tile.

    xp_ref : (T, Bt, 4H)  f32       precomputed x @ W_ih^T + (b_ih + b_hh),
                                    gate columns ordered (i, f, o, g)
    whh_ref: (H, 4H)      f32/bf16  W_hh^T, same gate-column order
    wfc_ref: (H, Op)      f32       fc.weight.T, output dim padded to lane multiple
    bfc_ref: (1, Op)      f32
    out_ref: (Bt, Op)     f32
    """
    T, Bt, _ = xp_ref.shape
    H = whh_ref.shape[0]
    mm_dtype = whh_ref.dtype   # operand dtype for the recurrent MXU matmul

    h0 = jnp.zeros((Bt, H), jnp.float32)
    c0 = jnp.zeros((Bt, H), jnp.float32)

    def step(t, carry):
        h, c = carry
        # Only the recurrent projection lives on the serial chain; input projection
        # and bias were hoisted to the wrapper. Accumulation stays f32.
        gates = xp_ref[t] + jnp.dot(h.astype(mm_dtype), whh_ref[...],
                                    preferred_element_type=jnp.float32)
        # Gate order (i, f, o, g): one merged sigmoid over (Bt, 3H), one tanh.
        ifo = jax.nn.sigmoid(gates[:, : 3 * H])
        g = jnp.tanh(gates[:, 3 * H:])
        i = ifo[:, 0 * H: 1 * H]
        f = ifo[:, 1 * H: 2 * H]
        o = ifo[:, 2 * H: 3 * H]
        c_new = f * c + i * g
        h_new = o * jnp.tanh(c_new)
        return h_new, c_new

    # T is static; full unroll keeps h/c in vregs and lets the LLO scheduler overlap
    # step-t MXU pushes with step-(t-1) EUP/VPU tail work.
    # (Further option, not needed at these sizes: stage W_hh^T once in MXU weight
    #  registers via pltpu.matmul_push_rhs / matmul_acc_lhs / matmul_pop.)
    h_last, _ = lax.fori_loop(0, T, step, (h0, c0), unroll=True)

    # fc on the last hidden state (== out[:, -1, :] for a 1-layer LSTM).
    out_ref[...] = (jnp.dot(h_last, wfc_ref[...], preferred_element_type=jnp.float32)
                    + bfc_ref[...]).astype(out_ref.dtype)


@functools.partial(jax.jit, static_argnames=("recurrent_dtype",))
def lstm_forward(x, w_ih, w_hh, b_ih, b_hh, w_fc, b_fc, *,
                 recurrent_dtype=jnp.float32):
    """x: (B, T, D_in) f32, PyTorch batch_first layout. Returns (B, OUTPUT_DIM) f32.

    recurrent_dtype: operand dtype of the in-kernel h @ W_hh^T matmul.
      jnp.float32  -> matches PyTorch numerics (validated at 1e-4).
      jnp.bfloat16 -> bf16-native MXU path for v6e / v7x (f32 accumulation,
                      f32 state and elementwise math; slightly looser tolerance).
    """
    B, T, D_in = x.shape
    H = w_hh.shape[1]
    O = w_fc.shape[0]
    G = 4 * H

    # Gate-column permutation (i, f, g, o) -> (i, f, o, g), applied consistently to
    # W_ih^T, W_hh^T and the combined bias.
    wih_t = _permute_gates_ifog(w_ih.T)                              # (D_in, 4H)
    whh_t = _permute_gates_ifog(w_hh.T).astype(recurrent_dtype)      # (H, 4H)
    b = _permute_gates_ifog(b_ih + b_hh)                             # (4H,)

    # Hoist the input projection + bias out of the serial recurrence: one batched
    # (B*T, D_in) @ (D_in, 4H) matmul in XLA; the kernel sees a lane-dense 4H layout.
    x_proj = (x.reshape(B * T, D_in) @ wih_t + b).reshape(B, T, G).astype(jnp.float32)

    # Batch tiling: small batches -> single tile padded to a sublane multiple;
    # large batches -> 128-row tiles on a "parallel" grid axis (v7x megacore, bounded
    # VMEM). Padded rows are zeros and are sliced away below.
    if B <= _LANE:
        B_tile = max(_SUBLANE, _round_up(B, _SUBLANE))
    else:
        B_tile = _LANE
    B_pad = _round_up(max(B, B_tile), B_tile)
    x_proj = jnp.zeros((B_pad, T, G), jnp.float32).at[:B].set(x_proj)
    x_proj_tm = jnp.transpose(x_proj, (1, 0, 2))                     # (T, B_pad, 4H)

    # Pad the fc output dim to a lane multiple so the (single) final store is an
    # unmasked, lane-dense vst; sliced back after the call.
    O_pad = _round_up(O, _LANE)
    wfc_t = jnp.zeros((H, O_pad), jnp.float32).at[:, :O].set(w_fc.T)
    bfc = jnp.zeros((1, O_pad), jnp.float32).at[:, :O].set(b_fc.reshape(1, O))

    grid = (B_pad // B_tile,)

    out_pad = pl.pallas_call(
        _lstm_fc_kernel,
        out_shape=jax.ShapeDtypeStruct((B_pad, O_pad), jnp.float32),
        grid_spec=pltpu.PrefetchScalarGridSpec(
            num_scalar_prefetch=0,
            grid=grid,
            in_specs=[
                pl.BlockSpec((T, B_tile, G), lambda bt: (0, bt, 0)),   # x_proj tile
                pl.BlockSpec((H, G), lambda bt: (0, 0)),               # W_hh^T
                pl.BlockSpec((H, O_pad), lambda bt: (0, 0)),           # W_fc^T
                pl.BlockSpec((1, O_pad), lambda bt: (0, 0)),           # b_fc
            ],
            out_specs=pl.BlockSpec((B_tile, O_pad), lambda bt: (bt, 0)),
        ),
        compiler_params=pltpu.CompilerParams(
            dimension_semantics=("parallel",)),
    )(x_proj_tm, whh_t, wfc_t, bfc)

    return out_pad[:B, :O]


def _reference_forward(x, w_ih, w_hh, b_ih, b_hh, w_fc, b_fc):
    """Pure-JAX reference (PyTorch LSTM semantics) for validation."""
    B, T, _ = x.shape
    H = w_hh.shape[1]
    h = jnp.zeros((B, H), jnp.float32)
    c = jnp.zeros((B, H), jnp.float32)
    for t in range(T):
        gates = x[:, t, :] @ w_ih.T + b_ih + h @ w_hh.T + b_hh
        i = jax.nn.sigmoid(gates[:, 0 * H:1 * H])
        f = jax.nn.sigmoid(gates[:, 1 * H:2 * H])
        g = jnp.tanh(gates[:, 2 * H:3 * H])
        o = jax.nn.sigmoid(gates[:, 3 * H:4 * H])
        c = f * c + i * g
        h = o * jnp.tanh(c)
    return h @ w_fc.T + b_fc


if __name__ == "__main__":
    key = jax.random.PRNGKey(0)
    B, T = 2, 8
    H, D_in, O = HIDDEN_SIZE, INPUT_SIZE, OUTPUT_DIM

    keys = jax.random.split(key, 8)
    bound = 1.0 / (H ** 0.5)   # PyTorch default uniform(-1/sqrt(H), 1/sqrt(H))
    w_ih = jax.random.uniform(keys[0], (4 * H, D_in), jnp.float32, -bound, bound)
    w_hh = jax.random.uniform(keys[1], (4 * H, H), jnp.float32, -bound, bound)
    b_ih = jax.random.uniform(keys[2], (4 * H,), jnp.float32, -bound, bound)
    b_hh = jax.random.uniform(keys[3], (4 * H,), jnp.float32, -bound, bound)
    w_fc = jax.random.uniform(keys[4], (O, H), jnp.float32, -bound, bound)
    b_fc = jax.random.uniform(keys[5], (O,), jnp.float32, -bound, bound)

    x = jax.random.normal(keys[6], (B, T, D_in), jnp.float32)

    ref = _reference_forward(x, w_ih, w_hh, b_ih, b_hh, w_fc, b_fc)

    # Exact-semantics path (f32 recurrent matmul) — strict tolerance.
    out = lstm_forward(x, w_ih, w_hh, b_ih, b_hh, w_fc, b_fc,
                       recurrent_dtype=jnp.float32)
    out = jax.block_until_ready(out)
    assert out.shape == (B, O), out.shape
    assert jnp.allclose(out, ref, atol=1e-4, rtol=1e-4), (out, ref)

    # bf16 MXU-operand path (v6e / v7x perf option) — f32 accumulation, looser tolerance.
    out_bf16 = lstm_forward(x, w_ih, w_hh, b_ih, b_hh, w_fc, b_fc,
                            recurrent_dtype=jnp.bfloat16)
    out_bf16 = jax.block_until_ready(out_bf16)
    assert out_bf16.shape == (B, O), out_bf16.shape
    assert jnp.allclose(out_bf16, ref, atol=2e-2, rtol=2e-2), (out_bf16, ref)

    print("KERNEL_OK")
</pallas_src>

<mosaic_0001>
module attributes {stable_mosaic.version = 11 : i64} {
  func.func @_lstm_fc_kernel(%arg0: i32, %arg1: memref<8x8x512xf32, #tpu.memory_space<vmem>>, %arg2: memref<128x512xf32, #tpu.memory_space<vmem>>, %arg3: memref<128x128xf32, #tpu.memory_space<vmem>>, %arg4: memref<1x128xf32, #tpu.memory_space<vmem>>, %arg5: memref<8x128xf32, #tpu.memory_space<vmem>>) attributes {dimension_semantics = [#tpu.dimension_semantics<parallel>], iteration_bounds = array<i64: 1>, scalar_prefetch = 0 : i64, scratch_operands = 0 : i64, tpu.core_type = #tpu.core_type<tc>, window_params = [{transform_indices = @transform_0, window_bounds = array<i64: 8, 8, 512>}, {pipeline_mode = #tpu.pipeline_mode<synchronous>, transform_indices = @transform_1, window_bounds = array<i64: 128, 512>}, {pipeline_mode = #tpu.pipeline_mode<synchronous>, transform_indices = @transform_2, window_bounds = array<i64: 128, 128>}, {pipeline_mode = #tpu.pipeline_mode<synchronous>, transform_indices = @transform_3, window_bounds = array<i64: 1, 128>}, {transform_indices = @transform_4, window_bounds = array<i64: 8, 128>}]} {
    %cst = arith.constant 0.000000e+00 : f32
    %0 = vector.broadcast %cst : f32 to vector<8x128xf32>
    %cst_0 = arith.constant 0.000000e+00 : f32
    %1 = vector.broadcast %cst_0 : f32 to vector<8x128xf32>
    %c0_i32 = arith.constant 0 : i32
    %2 = arith.index_cast %c0_i32 : i32 to index
    %c0 = arith.constant 0 : index
    %c0_1 = arith.constant 0 : index
    %3 = vector.load %arg1[%2, %c0, %c0_1] : memref<8x8x512xf32, #tpu.memory_space<vmem>>, vector<1x8x512xf32>
    %4 = vector.shape_cast %3 : vector<1x8x512xf32> to vector<8x512xf32>
    %c0_2 = arith.constant 0 : index
    %c0_3 = arith.constant 0 : index
    %5 = vector.load %arg2[%c0_2, %c0_3] : memref<128x512xf32, #tpu.memory_space<vmem>>, vector<128x512xf32>
    %cst_4 = arith.constant dense<0.000000e+00> : vector<8x512xf32>
    %6 = tpu.matmul %0, %5, %cst_4 {dimension_numbers = #tpu.dot_dimension_numbers<[1], [0], [0], [1], [0, 0, 1, 1], [], []>} : vector<8x128xf32>, vector<128x512xf32>, vector<8x512xf32> -> vector<8x512xf32>
    %7 = arith.addf %4, %6 : vector<8x512xf32>
    %8 = vector.extract_strided_slice %7 {offsets = [0, 0], sizes = [8, 384], strides = [1, 1]} : vector<8x512xf32> to vector<8x384xf32>
    %9 = arith.negf %8 : vector<8x384xf32>
    %10 = math.exp %9 : vector<8x384xf32>
    %cst_5 = arith.constant 1.000000e+00 : f32
    %11 = vector.broadcast %cst_5 : f32 to vector<8x384xf32>
    %12 = arith.addf %11, %10 : vector<8x384xf32>
    %13 = arith.divf %11, %12 : vector<8x384xf32>
    %14 = vector.extract_strided_slice %7 {offsets = [0, 384], sizes = [8, 128], strides = [1, 1]} : vector<8x512xf32> to vector<8x128xf32>
    %15 = math.tanh %14 : vector<8x128xf32>
    %16 = vector.extract_strided_slice %13 {offsets = [0, 0], sizes = [8, 128], strides = [1, 1]} : vector<8x384xf32> to vector<8x128xf32>
    %17 = vector.extract_strided_slice %13 {offsets = [0, 128], sizes = [8, 128], strides = [1, 1]} : vector<8x384xf32> to vector<8x128xf32>
    %18 = vector.extract_strided_slice %13 {offsets = [0, 256], sizes = [8, 128], strides = [1, 1]} : vector<8x384xf32> to vector<8x128xf32>
    %19 = arith.mulf %17, %1 : vector<8x128xf32>
    %20 = arith.mulf %16, %15 : vector<8x128xf32>
    %21 = arith.addf %19, %20 : vector<8x128xf32>
    %22 = math.tanh %21 : vector<8x128xf32>
    %23 = arith.mulf %18, %22 : vector<8x128xf32>
    %c1_i32 = arith.constant 1 : i32
    %24 = arith.index_cast %c1_i32 : i32 to index
    %c0_6 = arith.constant 0 : index
    %c0_7 = arith.constant 0 : index
    %25 = vector.load %arg1[%24, %c0_6, %c0_7] : memref<8x8x512xf32, #tpu.memory_space<vmem>>, vector<1x8x512xf32>
    %26 = vector.shape_cast %25 : vector<1x8x512xf32> to vector<8x512xf32>
    %c0_8 = arith.constant 0 : index
    %c0_9 = arith.constant 0 : index
    %27 = vector.load %arg2[%c0_8, %c0_9] : memref<128x512xf32, #tpu.memory_space<vmem>>, vector<128x512xf32>
    %cst_10 = arith.constant dense<0.000000e+00> : vector<8x512xf32>
    %28 = tpu.matmul %23, %27, %cst_10 {dimension_numbers = #tpu.dot_dimension_numbers<[1], [0], [0], [1], [0, 0, 1, 1], [], []>} : vector<8x128xf32>, vector<128x512xf32>, vector<8x512xf32> -> vector<8x512xf32>
    %29 = arith.addf %26, %28 : vector<8x512xf32>
    %30 = vector.extract_strided_slice %29 {offsets = [0, 0], sizes = [8, 384], strides = [1, 1]} : vector<8x512xf32> to vector<8x384xf32>
    %31 = arith.negf %30 : vector<8x384xf32>
    %32 = math.exp %31 : vector<8x384xf32>
    %cst_11 = arith.constant 1.000000e+00 : f32
    %33 = vector.broadcast %cst_11 : f32 to vector<8x384xf32>
    %34 = arith.addf %33, %32 : vector<8x384xf32>
    %35 = arith.divf %33, %34 : vector<8x384xf32>
    %36 = vector.extract_strided_slice %29 {offsets = [0, 384], sizes = [8, 128], strides = [1, 1]} : vector<8x512xf32> to vector<8x128xf32>
    %37 = math.tanh %36 : vector<8x128xf32>
    %38 = vector.extract_strided_slice %35 {offsets = [0, 0], sizes = [8, 128], strides = [1, 1]} : vector<8x384xf32> to vector<8x128xf32>
    %39 = vector.extract_strided_slice %35 {offsets = [0, 128], sizes = [8, 128], strides = [1, 1]} : vector<8x384xf32> to vector<8x128xf32>
    %40 = vector.extract_strided_slice %35 {offsets = [0, 256], sizes = [8, 128], strides = [1, 1]} : vector<8x384xf32> to vector<8x128xf32>
    %41 = arith.mulf %39, %21 : vector<8x128xf32>
    %42 = arith.mulf %38, %37 : vector<8x128xf32>
    %43 = arith.addf %41, %42 : vector<8x128xf32>
    %44 = math.tanh %43 : vector<8x128xf32>
    %45 = arith.mulf %40, %44 : vector<8x128xf32>
    %c2_i32 = arith.constant 2 : i32
    %46 = arith.index_cast %c2_i32 : i32 to index
    %c0_12 = arith.constant 0 : index
    %c0_13 = arith.constant 0 : index
    %47 = vector.load %arg1[%46, %c0_12, %c0_13] : memref<8x8x512xf32, #tpu.memory_space<vmem>>, vector<1x8x512xf32>
    %48 = vector.shape_cast %47 : vector<1x8x512xf32> to vector<8x512xf32>
    %c0_14 = arith.constant 0 : index
    %c0_15 = arith.constant 0 : index
    %49 = vector.load %arg2[%c0_14, %c0_15] : memref<128x512xf32, #tpu.memory_space<vmem>>, vector<128x512xf32>
    %cst_16 = arith.constant dense<0.000000e+00> : vector<8x512xf32>
    %50 = tpu.matmul %45, %49, %cst_16 {dimension_numbers = #tpu.dot_dimension_numbers<[1], [0], [0], [1], [0, 0, 1, 1], [], []>} : vector<8x128xf32>, vector<128x512xf32>, vector<8x512xf32> -> vector<8x512xf32>
    %51 = arith.addf %48, %50 : vector<8x512xf32>
    %52 = vector.extract_strided_slice %51 {offsets = [0, 0], sizes = [8, 384], strides = [1, 1]} : vector<8x512xf32> to vector<8x384xf32>
    %53 = arith.negf %52 : vector<8x384xf32>
    %54 = math.exp %53 : vector<8x384xf32>
    %cst_17 = arith.constant 1.000000e+00 : f32
    %55 = vector.broadcast %cst_17 : f32 to vector<8x384xf32>
    %56 = arith.addf %55, %54 : vector<8x384xf32>
    %57 = arith.divf %55, %56 : vector<8x384xf32>
    %58 = vector.extract_strided_slice %51 {offsets = [0, 384], sizes = [8, 128], strides = [1, 1]} : vector<8x512xf32> to vector<8x128xf32>
    %59 = math.tanh %58 : vector<8x128xf32>
    %60 = vector.extract_strided_slice %57 {offsets = [0, 0], sizes = [8, 128], strides = [1, 1]} : vector<8x384xf32> to vector<8x128xf32>
    %61 = vector.extract_strided_slice %57 {offsets = [0, 128], sizes = [8, 128], strides = [1, 1]} : vector<8x384xf32> to vector<8x128xf32>
    %62 = vector.extract_strided_slice %57 {offsets = [0, 256], sizes = [8, 128], strides = [1, 1]} : vector<8x384xf32> to vector<8x128xf32>
    %63 = arith.mulf %61, %43 : vector<8x128xf32>
    %64 = arith.mulf %60, %59 : vector<8x128xf32>
    %65 = arith.addf %63, %64 : vector<8x128xf32>
    %66 = math.tanh %65 : vector<8x128xf32>
    %67 = arith.mulf %62, %66 : vector<8x128xf32>
    %c3_i32 = arith.constant 3 : i32
    %68 = arith.index_cast %c3_i32 : i32 to index
    %c0_18 = arith.constant 0 : index
    %c0_19 = arith.constant 0 : index
    %69 = vector.load %arg1[%68, %c0_18, %c0_19] : memref<8x8x512xf32, #tpu.memory_space<vmem>>, vector<1x8x512xf32>
    %70 = vector.shape_cast %69 : vector<1x8x512xf32> to vector<8x512xf32>
    %c0_20 = arith.constant 0 : index
    %c0_21 = arith.constant 0 : index
    %71 = vector.load %arg2[%c0_20, %c0_21] : memref<128x512xf32, #tpu.memory_space<vmem>>, vector<128x512xf32>
    %cst_22 = arith.constant dense<0.000000e+00> : vector<8x512xf32>
    %72 = tpu.matmul %67, %71, %cst_22 {dimension_numbers = #tpu.dot_dimension_numbers<[1], [0], [0], [1], [0, 0, 1, 1], [], []>} : vector<8x128xf32>, vector<128x512xf32>, vector<8x512xf32> -> vector<8x512xf32>
    %73 = arith.addf %70, %72 : vector<8x512xf32>
    %74 = vector.extract_strided_slice %73 {offsets = [0, 0], sizes = [8, 384], strides = [1, 1]} : vector<8x512xf32> to vector<8x384xf32>
    %75 = arith.negf %74 : vector<8x384xf32>
    %76 = math.exp %75 : vector<8x384xf32>
    %cst_23 = arith.constant 1.000000e+00 : f32
    %77 = vector.broadcast %cst_23 : f32 to vector<8x384xf32>
    %78 = arith.addf %77, %76 : vector<8x384xf32>
    %79 = arith.divf %77, %78 : vector<8x384xf32>
    %80 = vector.extract_strided_slice %73 {offsets = [0, 384], sizes = [8, 128], strides = [1, 1]} : vector<8x512xf32> to vector<8x128xf32>
    %81 = math.tanh %80 : vector<8x128xf32>
    %82 = vector.extract_strided_slice %79 {offsets = [0, 0], sizes = [8, 128], strides = [1, 1]} : vector<8x384xf32> to vector<8x128xf32>
    %83 = vector.extract_strided_slice %79 {offsets = [0, 128], sizes = [8, 128], strides = [1, 1]} : vector<8x384xf32> to vector<8x128xf32>
    %84 = vector.extract_strided_slice %79 {offsets = [0, 256], sizes = [8, 128], strides = [1, 1]} : vector<8x384xf32> to vector<8x128xf32>
    %85 = arith.mulf %83, %65 : vector<8x128xf32>
    %86 = arith.mulf %82, %81 : vector<8x128xf32>
    %87 = arith.addf %85, %86 : vector<8x128xf32>
    %88 = math.tanh %87 : vector<8x128xf32>
    %89 = arith.mulf %84, %88 : vector<8x128xf32>
    %c4_i32 = arith.constant 4 : i32
    %90 = arith.index_cast %c4_i32 : i32 to index
    %c0_24 = arith.constant 0 : index
    %c0_25 = arith.constant 0 : index
    %91 = vector.load %arg1[%90, %c0_24, %c0_25] : memref<8x8x512xf32, #tpu.memory_space<vmem>>, vector<1x8x512xf32>
    %92 = vector.shape_cast %91 : vector<1x8x512xf32> to vector<8x512xf32>
    %c0_26 = arith.constant 0 : index
    %c0_27 = arith.constant 0 : index
    %93 = vector.load %arg2[%c0_26, %c0_27] : memref<128x512xf32, #tpu.memory_space<vmem>>, vector<128x512xf32>
    %cst_28 = arith.constant dense<0.000000e+00> : vector<8x512xf32>
    %94 = tpu.matmul %89, %93, %cst_28 {dimension_numbers = #tpu.dot_dimension_numbers<[1], [0], [0], [1], [0, 0, 1, 1], [], []>} : vector<8x128xf32>, vector<128x512xf32>, vector<8x512xf32> -> vector<8x512xf32>
    %95 = arith.addf %92, %94 : vector<8x512xf32>
    %96 = vector.extract_strided_slice %95 {offsets = [0, 0], sizes = [8, 384], strides = [1, 1]} : vector<8x512xf32> to vector<8x384xf32>
    %97 = arith.negf %96 : vector<8x384xf32>
    %98 = math.exp %97 : vector<8x384xf32>
    %cst_29 = arith.constant 1.000000e+00 : f32
    %99 = vector.broadcast %cst_29 : f32 to vector<8x384xf32>
    %100 = arith.addf %99, %98 : vector<8x384xf32>
    %101 = arith.divf %99, %100 : vector<8x384xf32>
    %102 = vector.extract_strided_slice %95 {offsets = [0, 384], sizes = [8, 128], strides = [1, 1]} : vector<8x512xf32> to vector<8x128xf32>
    %103 = math.tanh %102 : vector<8x128xf32>
    %104 = vector.extract_strided_slice %101 {offsets = [0, 0], sizes = [8, 128], strides = [1, 1]} : vector<8x384xf32> to vector<8x128xf32>
    %105 = vector.extract_strided_slice %101 {offsets = [0, 128], sizes = [8, 128], strides = [1, 1]} : vector<8x384xf32> to vector<8x128xf32>
    %106 = vector.extract_strided_slice %101 {offsets = [0, 256], sizes = [8, 128], strides = [1, 1]} : vector<8x384xf32> to vector<8x128xf32>
    %107 = arith.mulf %105, %87 : vector<8x128xf32>
    %108 = arith.mulf %104, %103 : vector<8x128xf32>
    %109 = arith.addf %107, %108 : vector<8x128xf32>
    %110 = math.tanh %109 : vector<8x128xf32>
    %111 = arith.mulf %106, %110 : vector<8x128xf32>
    %c5_i32 = arith.constant 5 : i32
    %112 = arith.index_cast %c5_i32 : i32 to index
    %c0_30 = arith.constant 0 : index
    %c0_31 = arith.constant 0 : index
    %113 = vector.load %arg1[%112, %c0_30, %c0_31] : memref<8x8x512xf32, #tpu.memory_space<vmem>>, vector<1x8x512xf32>
    %114 = vector.shape_cast %113 : vector<1x8x512xf32> to vector<8x512xf32>
    %c0_32 = arith.constant 0 : index
    %c0_33 = arith.constant 0 : index
    %115 = vector.load %arg2[%c0_32, %c0_33] : memref<128x512xf32, #tpu.memory_space<vmem>>, vector<128x512xf32>
    %cst_34 = arith.constant dense<0.000000e+00> : vector<8x512xf32>
    %116 = tpu.matmul %111, %115, %cst_34 {dimension_numbers = #tpu.dot_dimension_numbers<[1], [0], [0], [1], [0, 0, 1, 1], [], []>} : vector<8x128xf32>, vector<128x512xf32>, vector<8x512xf32> -> vector<8x512xf32>
    %117 = arith.addf %114, %116 : vector<8x512xf32>
    %118 = vector.extract_strided_slice %117 {offsets = [0, 0], sizes = [8, 384], strides = [1, 1]} : vector<8x512xf32> to vector<8x384xf32>
    %119 = arith.negf %118 : vector<8x384xf32>
    %120 = math.exp %119 : vector<8x384xf32>
    %cst_35 = arith.constant 1.000000e+00 : f32
    %121 = vector.broadcast %cst_35 : f32 to vector<8x384xf32>
    %122 = arith.addf %121, %120 : vector<8x384xf32>
    %123 = arith.divf %121, %122 : vector<8x384xf32>
    %124 = vector.extract_strided_slice %117 {offsets = [0, 384], sizes = [8, 128], strides = [1, 1]} : vector<8x512xf32> to vector<8x128xf32>
    %125 = math.tanh %124 : vector<8x128xf32>
    %126 = vector.extract_strided_slice %123 {offsets = [0, 0], sizes = [8, 128], strides = [1, 1]} : vector<8x384xf32> to vector<8x128xf32>
    %127 = vector.extract_strided_slice %123 {offsets = [0, 128], sizes = [8, 128], strides = [1, 1]} : vector<8x384xf32> to vector<8x128xf32>
    %128 = vector.extract_strided_slice %123 {offsets = [0, 256], sizes = [8, 128], strides = [1, 1]} : vector<8x384xf32> to vector<8x128xf32>
    %129 = arith.mulf %127, %109 : vector<8x128xf32>
    %130 = arith.mulf %126, %125 : vector<8x128xf32>
    %131 = arith.addf %129, %130 : vector<8x128xf32>
    %132 = math.tanh %131 : vector<8x128xf32>
    %133 = arith.mulf %128, %132 : vector<8x128xf32>
    %c6_i32 = arith.constant 6 : i32
    %134 = arith.index_cast %c6_i32 : i32 to index
    %c0_36 = arith.constant 0 : index
    %c0_37 = arith.constant 0 : index
    %135 = vector.load %arg1[%134, %c0_36, %c0_37] : memref<8x8x512xf32, #tpu.memory_space<vmem>>, vector<1x8x512xf32>
    %136 = vector.shape_cast %135 : vector<1x8x512xf32> to vector<8x512xf32>
    %c0_38 = arith.constant 0 : index
    %c0_39 = arith.constant 0 : index
    %137 = vector.load %arg2[%c0_38, %c0_39] : memref<128x512xf32, #tpu.memory_space<vmem>>, vector<128x512xf32>
    %cst_40 = arith.constant dense<0.000000e+00> : vector<8x512xf32>
    %138 = tpu.matmul %133, %137, %cst_40 {dimension_numbers = #tpu.dot_dimension_numbers<[1], [0], [0], [1], [0, 0, 1, 1], [], []>} : vector<8x128xf32>, vector<128x512xf32>, vector<8x512xf32> -> vector<8x512xf32>
    %139 = arith.addf %136, %138 : vector<8x512xf32>
    %140 = vector.extract_strided_slice %139 {offsets = [0, 0], sizes = [8, 384], strides = [1, 1]} : vector<8x512xf32> to vector<8x384xf32>
    %141 = arith.negf %140 : vector<8x384xf32>
    %142 = math.exp %141 : vector<8x384xf32>
    %cst_41 = arith.constant 1.000000e+00 : f32
    %143 = vector.broadcast %cst_41 : f32 to vector<8x384xf32>
    %144 = arith.addf %143, %142 : vector<8x384xf32>
    %145 = arith.divf %143, %144 : vector<8x384xf32>
    %146 = vector.extract_strided_slice %139 {offsets = [0, 384], sizes = [8, 128], strides = [1, 1]} : vector<8x512xf32> to vector<8x128xf32>
    %147 = math.tanh %146 : vector<8x128xf32>
    %148 = vector.extract_strided_slice %145 {offsets = [0, 0], sizes = [8, 128], strides = [1, 1]} : vector<8x384xf32> to vector<8x128xf32>
    %149 = vector.extract_strided_slice %145 {offsets = [0, 128], sizes = [8, 128], strides = [1, 1]} : vector<8x384xf32> to vector<8x128xf32>
    %150 = vector.extract_strided_slice %145 {offsets = [0, 256], sizes = [8, 128], strides = [1, 1]} : vector<8x384xf32> to vector<8x128xf32>
    %151 = arith.mulf %149, %131 : vector<8x128xf32>
    %152 = arith.mulf %148, %147 : vector<8x128xf32>
    %153 = arith.addf %151, %152 : vector<8x128xf32>
    %154 = math.tanh %153 : vector<8x128xf32>
    %155 = arith.mulf %150, %154 : vector<8x128xf32>
    %c7_i32 = arith.constant 7 : i32
    %156 = arith.index_cast %c7_i32 : i32 to index
    %c0_42 = arith.constant 0 : index
    %c0_43 = arith.constant 0 : index
    %157 = vector.load %arg1[%156, %c0_42, %c0_43] : memref<8x8x512xf32, #tpu.memory_space<vmem>>, vector<1x8x512xf32>
    %158 = vector.shape_cast %157 : vector<1x8x512xf32> to vector<8x512xf32>
    %c0_44 = arith.constant 0 : index
    %c0_45 = arith.constant 0 : index
    %159 = vector.load %arg2[%c0_44, %c0_45] : memref<128x512xf32, #tpu.memory_space<vmem>>, vector<128x512xf32>
    %cst_46 = arith.constant dense<0.000000e+00> : vector<8x512xf32>
    %160 = tpu.matmul %155, %159, %cst_46 {dimension_numbers = #tpu.dot_dimension_numbers<[1], [0], [0], [1], [0, 0, 1, 1], [], []>} : vector<8x128xf32>, vector<128x512xf32>, vector<8x512xf32> -> vector<8x512xf32>
    %161 = arith.addf %158, %160 : vector<8x512xf32>
    %162 = vector.extract_strided_slice %161 {offsets = [0, 0], sizes = [8, 384], strides = [1, 1]} : vector<8x512xf32> to vector<8x384xf32>
    %163 = arith.negf %162 : vector<8x384xf32>
    %164 = math.exp %163 : vector<8x384xf32>
    %cst_47 = arith.constant 1.000000e+00 : f32
    %165 = vector.broadcast %cst_47 : f32 to vector<8x384xf32>
    %166 = arith.addf %165, %164 : vector<8x384xf32>
    %167 = arith.divf %165, %166 : vector<8x384xf32>
    %168 = vector.extract_strided_slice %161 {offsets = [0, 384], sizes = [8, 128], strides = [1, 1]} : vector<8x512xf32> to vector<8x128xf32>
    %169 = math.tanh %168 : vector<8x128xf32>
    %170 = vector.extract_strided_slice %167 {offsets = [0, 0], sizes = [8, 128], strides = [1, 1]} : vector<8x384xf32> to vector<8x128xf32>
    %171 = vector.extract_strided_slice %167 {offsets = [0, 128], sizes = [8, 128], strides = [1, 1]} : vector<8x384xf32> to vector<8x128xf32>
    %172 = vector.extract_strided_slice %167 {offsets = [0, 256], sizes = [8, 128], strides = [1, 1]} : vector<8x384xf32> to vector<8x128xf32>
    %173 = arith.mulf %171, %153 : vector<8x128xf32>
    %174 = arith.mulf %170, %169 : vector<8x128xf32>
    %175 = arith.addf %173, %174 : vector<8x128xf32>
    %176 = math.tanh %175 : vector<8x128xf32>
    %177 = arith.mulf %172, %176 : vector<8x128xf32>
    %c8_i32 = arith.constant 8 : i32
    %c0_48 = arith.constant 0 : index
    %c0_49 = arith.constant 0 : index
    %178 = vector.load %arg3[%c0_48, %c0_49] : memref<128x128xf32, #tpu.memory_space<vmem>>, vector<128x128xf32>
    %cst_50 = arith.constant dense<0.000000e+00> : vector<8x128xf32>
    %179 = tpu.matmul %177, %178, %cst_50 {dimension_numbers = #tpu.dot_dimension_numbers<[1], [0], [0], [1], [0, 0, 1, 1], [], []>} : vector<8x128xf32>, vector<128x128xf32>, vector<8x128xf32> -> vector<8x128xf32>
    %c0_51 = arith.constant 0 : index
    %c0_52 = arith.constant 0 : index
    %180 = vector.load %arg4[%c0_51, %c0_52] : memref<1x128xf32, #tpu.memory_space<vmem>>, vector<1x128xf32>
    %181 = vector.broadcast %180 : vector<1x128xf32> to vector<8x128xf32>
    %182 = arith.addf %179, %181 : vector<8x128xf32>
    %c0_53 = arith.constant 0 : index
    %c0_54 = arith.constant 0 : index
    %183 = vector.load %arg5[%c0_53, %c0_54] : memref<8x128xf32, #tpu.memory_space<vmem>>, vector<8x128xf32>
    tpu.vector_store %arg5[%c0_53, %c0_54], %182 {strides = array<i32>} : memref<8x128xf32, #tpu.memory_space<vmem>>, vector<8x128xf32>,
    return
  }
  func.func @transform_0(%arg0: i32) -> (i32, i32, i32) {
    %c0_i32 = arith.constant 0 : i32
    %c0_i32_0 = arith.constant 0 : i32
    %c0_i32_1 = arith.constant 0 : i32
    return %c0_i32, %arg0, %c0_i32_0 : i32, i32, i32
  }
  func.func @transform_1(%arg0: i32) -> (i32, i32) {
    %c0_i32 = arith.constant 0 : i32
    %c0_i32_0 = arith.constant 0 : i32
    %c0_i32_1 = arith.constant 0 : i32
    return %c0_i32, %c0_i32_0 : i32, i32
  }
  func.func @transform_2(%arg0: i32) -> (i32, i32) {
    %c0_i32 = arith.constant 0 : i32
    %c0_i32_0 = arith.constant 0 : i32
    %c0_i32_1 = arith.constant 0 : i32
    return %c0_i32, %c0_i32_0 : i32, i32
  }
  func.func @transform_3(%arg0: i32) -> (i32, i32) {
    %c0_i32 = arith.constant 0 : i32
    %c0_i32_0 = arith.constant 0 : i32
    %c0_i32_1 = arith.constant 0 : i32
    return %c0_i32, %c0_i32_0 : i32, i32
  }
  func.func @transform_4(%arg0: i32) -> (i32, i32) {
    %c0_i32 = arith.constant 0 : i32
    %c0_i32_0 = arith.constant 0 : i32
    return %arg0, %c0_i32 : i32, i32
  }
}

</mosaic_0001>

<llo_original>
// kernel: lstm_forward.1
$region0: #{lstm_forward.1}
  #allocation0 [shape = 'u32[]', space=smem, size = 0x4, offset = 0x4, fixed_abs, tag = 'smem constant byte address 0x4 - core index']
  #allocation1 [shape = 'u32[144,128]{1,0:T(1,128)}', space=vmem, size = 0x12000, scoped, tag = 'internal scratch']
  %s0 = inlined_call_operand.vmem [shape: f32[8,8,512], index: 0, kind: input, shape index: {}]
  %s1 = inlined_call_operand.vmem [shape: f32[128,512], index: 1, kind: input, shape index: {}]
  %s2 = inlined_call_operand.vmem [shape: f32[128,128], index: 2, kind: input, shape index: {}]
  %s3 = inlined_call_operand.vmem [shape: f32[1,128], index: 3, kind: input, shape index: {}]
  %s4 = inlined_call_operand.vmem [shape: f32[8,128], index: 4, kind: output, shape index: {}]
  %s5 = sld [smem:[#allocation0]]
  $region26: #{lstm_forward.1} parent=0
    _
  %s7 = ssub.s32 1, %s5
  %s8 = scalar_select 0, %s7, %s5
  // Predicated region
  $region2: #{lstm_forward.1} parent=0 // pred_check
    _
  $region3: #{lstm_forward.1} parent=0 // pred_check_branch
    %10 = sbr.rel (0) target = $region5
  $region4: #{lstm_forward.1} parent=0 // pred_region
    _
  $region5: #{lstm_forward.1} parent=0 // pred_fallthru
    _
  // Predicated region
  $region6: #{lstm_forward.1} parent=0 // pred_check
    _
  $region7: #{lstm_forward.1} parent=0 // pred_check_branch
    %12 = sbr.rel (0) target = $region9
  $region8: #{lstm_forward.1} parent=0 // pred_region
    _
  $region9: #{lstm_forward.1} parent=0 // pred_fallthru
    _
  // Predicated region
  $region10: #{lstm_forward.1} parent=0 // pred_check
    _
  $region11: #{lstm_forward.1} parent=0 // pred_check_branch
    %14 = sbr.rel (0) target = $region13
  $region12: #{lstm_forward.1} parent=0 // pred_region
    _
  $region13: #{lstm_forward.1} parent=0 // pred_fallthru
    _
  // Predicated region
  $region14: #{lstm_forward.1} parent=0 // pred_check
    _
  $region15: #{lstm_forward.1} parent=0 // pred_check_branch
    %16 = sbr.rel (0) target = $region17
  $region16: #{lstm_forward.1} parent=0 // pred_region
    _
  $region17: #{lstm_forward.1} parent=0 // pred_fallthru
    _
  %v17 = vld [vmem:[%s0] sm:$0xff]
  %v18 = vld [vmem:[%s0 + $0x8] sm:$0xff]
  %v19 = vld [vmem:[%s0 + $0x10] sm:$0xff]
  %v20 = vld [vmem:[%s0 + $0x18] sm:$0xff]
  %v21 = vld [vmem:[%s1] sm:$0xff]
  %v22 = vld [vmem:[%s1 + $0x8] sm:$0xff]
  %v23 = vld [vmem:[%s1 + $0x10] sm:$0xff]
  %v24 = vld [vmem:[%s1 + $0x18] sm:$0xff]
  %v25 = vld [vmem:[%s1 + $0x20] sm:$0xff]
  %v26 = vld [vmem:[%s1 + $0x28] sm:$0xff]
  %v27 = vld [vmem:[%s1 + $0x30] sm:$0xff]
  %v28 = vld [vmem:[%s1 + $0x38] sm:$0xff]
  %v29 = vld [vmem:[%s1 + $0x40] sm:$0xff]
  %v30 = vld [vmem:[%s1 + $0x48] sm:$0xff]
  %v31 = vld [vmem:[%s1 + $0x50] sm:$0xff]
  %v32 = vld [vmem:[%s1 + $0x58] sm:$0xff]
  %v33 = vld [vmem:[%s1 + $0x60] sm:$0xff]
  %v34 = vld [vmem:[%s1 + $0x68] sm:$0xff]
  %v35 = vld [vmem:[%s1 + $0x70] sm:$0xff]
  %v36 = vld [vmem:[%s1 + $0x78] sm:$0xff]
  %v37 = vld [vmem:[%s1 + $0x80] sm:$0xff]
  %v38 = vld [vmem:[%s1 + $0x88] sm:$0xff]
  %v39 = vld [vmem:[%s1 + $0x90] sm:$0xff]
  %v40 = vld [vmem:[%s1 + $0x98] sm:$0xff]
  %v41 = vld [vmem:[%s1 + $0xa0] sm:$0xff]
  %v42 = vld [vmem:[%s1 + $0xa8] sm:$0xff]
  %v43 = vld [vmem:[%s1 + $0xb0] sm:$0xff]
  %v44 = vld [vmem:[%s1 + $0xb8] sm:$0xff]
  %v45 = vld [vmem:[%s1 + $0xc0] sm:$0xff]
  %v46 = vld [vmem:[%s1 + $0xc8] sm:$0xff]
  %v47 = vld [vmem:[%s1 + $0xd0] sm:$0xff]
  %v48 = vld [vmem:[%s1 + $0xd8] sm:$0xff]
  %v49 = vld [vmem:[%s1 + $0xe0] sm:$0xff]
  %v50 = vld [vmem:[%s1 + $0xe8] sm:$0xff]
  %v51 = vld [vmem:[%s1 + $0xf0] sm:$0xff]
  %v52 = vld [vmem:[%s1 + $0xf8] sm:$0xff]
  %v53 = vld [vmem:[%s1 + $0x100] sm:$0xff]
  %v54 = vld [vmem:[%s1 + $0x108] sm:$0xff]
  %v55 = vld [vmem:[%s1 + $0x110] sm:$0xff]
  %v56 = vld [vmem:[%s1 + $0x118] sm:$0xff]
  %v57 = vld [vmem:[%s1 + $0x120] sm:$0xff]
  %v58 = vld [vmem:[%s1 + $0x128] sm:$0xff]
  %v59 = vld [vmem:[%s1 + $0x130] sm:$0xff]
  %v60 = vld [vmem:[%s1 + $0x138] sm:$0xff]
  %v61 = vld [vmem:[%s1 + $0x140] sm:$0xff]
  %v62 = vld [vmem:[%s1 + $0x148] sm:$0xff]
  %v63 = vld [vmem:[%s1 + $0x150] sm:$0xff]
  %v64 = vld [vmem:[%s1 + $0x158] sm:$0xff]
  %v65 = vld [vmem:[%s1 + $0x160] sm:$0xff]
  %v66 = vld [vmem:[%s1 + $0x168] sm:$0xff]
  %v67 = vld [vmem:[%s1 + $0x170] sm:$0xff]
  %v68 = vld [vmem:[%s1 + $0x178] sm:$0xff]
  %v69 = vld [vmem:[%s1 + $0x180] sm:$0xff]
  %v70 = vld [vmem:[%s1 + $0x188] sm:$0xff]
  %v71 = vld [vmem:[%s1 + $0x190] sm:$0xff]
  %v72 = vld [vmem:[%s1 + $0x198] sm:$0xff]
  %v73 = vld [vmem:[%s1 + $0x1a0] sm:$0xff]
  %v74 = vld [vmem:[%s1 + $0x1a8] sm:$0xff]
  %v75 = vld [vmem:[%s1 + $0x1b0] sm:$0xff]
  %v76 = vld [vmem:[%s1 + $0x1b8] sm:$0xff]
  %v77 = vld [vmem:[%s1 + $0x1c0] sm:$0xff]
  %v78 = vld [vmem:[%s1 + $0x1c8] sm:$0xff]
  %v79 = vld [vmem:[%s1 + $0x1d0] sm:$0xff]
  %v80 = vld [vmem:[%s1 + $0x1d8] sm:$0xff]
  %v81 = vld [vmem:[%s1 + $0x1e0] sm:$0xff]
  %v82 = vld [vmem:[%s1 + $0x1e8] sm:$0xff]
  %v83 = vld [vmem:[%s1 + $0x1f0] sm:$0xff]
  %v84 = vld [vmem:[%s1 + $0x1f8] sm:$0xff]
  %85 = vmatprep.subr.mxu0 %v82
  %86 = vmatpush1.msra.mxu0 %v81
  %87 = vmatprep.subr.mxu0 %v78
  %88 = vmatpush1.msra.mxu0 %v77
  %89 = vmatprep.subr.mxu0 %v74
  %90 = vmatpush1.msra.mxu0 %v73
  %91 = vmatprep.subr.mxu0 %v70
  %92 = vmatpush1.msra.mxu0 %v69
  %93 = vmatprep.subr.mxu0 %v66
  %94 = vmatpush1.msra.mxu0 %v65
  %95 = vmatprep.subr.mxu0 %v62
  %96 = vmatpush1.msra.mxu0 %v61
  %97 = vmatprep.subr.mxu0 %v58
  %98 = vmatpush1.msra.mxu0 %v57
  %99 = vmatprep.subr.mxu0 %v54
  %100 = vmatpush1.msra.mxu0 %v53
  %101 = vmatprep.subr.mxu0 %v50
  %102 = vmatpush1.msra.mxu0 %v49
  %103 = vmatprep.subr.mxu0 %v46
  %104 = vmatpush1.msra.mxu0 %v45
  %105 = vmatprep.subr.mxu0 %v42
  %106 = vmatpush1.msra.mxu0 %v41
  %107 = vmatprep.subr.mxu0 %v38
  %108 = vmatpush1.msra.mxu0 %v37
  %109 = vmatprep.subr.mxu0 %v34
  %110 = vmatpush1.msra.mxu0 %v33
  %111 = vmatprep.subr.mxu0 %v30
  %112 = vmatpush1.msra.mxu0 %v29
  %113 = vmatprep.subr.mxu0 %v26
  %114 = vmatpush1.msra.mxu0 %v25
  %115 = vmatprep.subr.mxu0 %v22
  %116 = vmatpush1.msra.mxu0 %v21
  %117 = vmatprep.subr.mxu0 0.0
  %118 = vmatpush2.msra.mxu0 0.0
  %119 = vmatprep.subr.mxu0 0.0
  %120 = vmatpush2.msra.mxu0 0.0
  %121 = vmatprep.subr.mxu0 0.0
  %122 = vmatpush2.msra.mxu0 0.0
  %123 = vmatprep.subr.mxu0 0.0
  %124 = vmatpush2.msra.mxu0 0.0
  %125 = vmatprep.subr.mxu0 0.0
  %126 = vmatpush2.msra.mxu0 0.0
  %127 = vmatprep.subr.mxu0 0.0
  %128 = vmatpush2.msra.mxu0 0.0
  %129 = vmatprep.subr.mxu0 0.0
  %130 = vmatpush2.msra.mxu0 0.0
  %131 = vmatprep.subr.mxu0 0.0
  %132 = vmatpush2.msra.mxu0 0.0
  %133 = vmatprep.subr.mxu0 0.0
  %134 = vmatpush2.msra.mxu0 0.0
  %135 = vmatprep.subr.mxu0 0.0
  %136 = vmatpush2.msra.mxu0 0.0
  %137 = vmatprep.subr.mxu0 0.0
  %138 = vmatpush2.msra.mxu0 0.0
  %139 = vmatprep.subr.mxu0 0.0
  %140 = vmatpush2.msra.mxu0 0.0
  %141 = vmatprep.subr.mxu0 0.0
  %142 = vmatpush2.msra.mxu0 0.0
  %143 = vmatprep.subr.mxu0 0.0
  %144 = vmatpush2.msra.mxu0 0.0
  %145 = vmatprep.subr.mxu0 0.0
  %146 = vmatpush2.msra.mxu0 0.0
  %147 = vmatprep.subr.mxu0 0.0
  %148 = vmatpush2.msra.mxu0 0.0
  %149 = vmatprep.mubr.f32.mxu0 0.0
  %150 = vmatmul.mubr.f32.gmra.mxu0 0.0
  %v151 = vpop.f32.mrf.mxu0
  %v152 = vadd.f32 0.0, %v151
  %v153 = vpop.f32.mrf.mxu0
  %v154 = vadd.f32 0.0, %v153
  %155 = vdwg.mxu0
  %156 = vmatprep.subr.mxu0 %v84
  %157 = vmatpush1.msra.mxu0 %v83
  %158 = vmatprep.subr.mxu0 %v80
  %159 = vmatpush1.msra.mxu0 %v79
  %160 = vmatprep.subr.mxu0 %v76
  %161 = vmatpush1.msra.mxu0 %v75
  %162 = vmatprep.subr.mxu0 %v72
  %163 = vmatpush1.msra.mxu0 %v71
  %164 = vmatprep.subr.mxu0 %v68
  %165 = vmatpush1.msra.mxu0 %v67
  %166 = vmatprep.subr.mxu0 %v64
  %167 = vmatpush1.msra.mxu0 %v63
  %168 = vmatprep.subr.mxu0 %v60
  %169 = vmatpush1.msra.mxu0 %v59
  %170 = vmatprep.subr.mxu0 %v56
  %171 = vmatpush1.msra.mxu0 %v55
  %172 = vmatprep.subr.mxu0 %v52
  %173 = vmatpush1.msra.mxu0 %v51
  %174 = vmatprep.subr.mxu0 %v48
  %175 = vmatpush1.msra.mxu0 %v47
  %176 = vmatprep.subr.mxu0 %v44
  %177 = vmatpush1.msra.mxu0 %v43
  %178 = vmatprep.subr.mxu0 %v40
  %179 = vmatpush1.msra.mxu0 %v39
  %180 = vmatprep.subr.mxu0 %v36
  %181 = vmatpush1.msra.mxu0 %v35
  %182 = vmatprep.subr.mxu0 %v32
  %183 = vmatpush1.msra.mxu0 %v31
  %184 = vmatprep.subr.mxu0 %v28
  %185 = vmatpush1.msra.mxu0 %v27
  %186 = vmatprep.subr.mxu0 %v24
  %187 = vmatpush1.msra.mxu0 %v23
  %188 = vmatprep.subr.mxu0 0.0
  %189 = vmatpush2.msra.mxu0 0.0
  %190 = vmatprep.subr.mxu0 0.0
  %191 = vmatpush2.msra.mxu0 0.0
  %192 = vmatprep.subr.mxu0 0.0
  %193 = vmatpush2.msra.mxu0 0.0
  %194 = vmatprep.subr.mxu0 0.0
  %195 = vmatpush2.msra.mxu0 0.0
  %196 = vmatprep.subr.mxu0 0.0
  %197 = vmatpush2.msra.mxu0 0.0
  %198 = vmatprep.subr.mxu0 0.0
  %199 = vmatpush2.msra.mxu0 0.0
  %200 = vmatprep.subr.mxu0 0.0
  %201 = vmatpush2.msra.mxu0 0.0
  %202 = vmatprep.subr.mxu0 0.0
  %203 = vmatpush2.msra.mxu0 0.0
  %204 = vmatprep.subr.mxu0 0.0
  %205 = vmatpush2.msra.mxu0 0.0
  %206 = vmatprep.subr.mxu0 0.0
  %207 = vmatpush2.msra.mxu0 0.0
  %208 = vmatprep.subr.mxu0 0.0
  %209 = vmatpush2.msra.mxu0 0.0
  %210 = vmatprep.subr.mxu0 0.0
  %211 = vmatpush2.msra.mxu0 0.0
  %212 = vmatprep.subr.mxu0 0.0
  %213 = vmatpush2.msra.mxu0 0.0
  %214 = vmatprep.subr.mxu0 0.0
  %215 = vmatpush2.msra.mxu0 0.0
  %216 = vmatprep.subr.mxu0 0.0
  %217 = vmatpush2.msra.mxu0 0.0
  %218 = vmatprep.subr.mxu0 0.0
  %219 = vmatpush2.msra.mxu0 0.0
  %220 = vmatprep.mubr.f32.mxu0 0.0
  %221 = vmatmul.mubr.f32.gmra.mxu0 0.0
  %v222 = vpop.f32.mrf.mxu0
  %v223 = vadd.f32 0.0, %v222
  %v224 = vpop.f32.mrf.mxu0
  %v225 = vadd.f32 0.0, %v224
  %226 = vdwg.mxu0
  %v227 = vadd.f32 %v17, %v152
  %v228 = vadd.f32 %v18, %v154
  %v229 = vadd.f32 %v19, %v223
  %v230 = vadd.f32 %v20, %v225
  %v231 = vxor.u32 %v227, 2147483648
  %v232 = vxor.u32 %v228, 2147483648
  %v233 = vxor.u32 %v229, 2147483648
  %v234 = vmul.f32 %v231, 1.442695
  %v235 = vpow.pop %v234
  %v236 = vmul.f32 %v232, 1.442695
  %v237 = vpow.pop %v236
  %v238 = vmul.f32 %v233, 1.442695
  %v239 = vpow.pop %v238
  %v240 = vadd.f32 %v235, 1.0
  %v241 = vadd.f32 %v237, 1.0
  %v242 = vadd.f32 %v239, 1.0
  %v243 = vrcp.pop %v240
  %v244 = vmul.f32 1.0, %v243
  %v245 = vrcp.pop %v241
  %v246 = vmul.f32 1.0, %v245
  %v247 = vrcp.pop %v242
  %v248 = vmul.f32 1.0, %v247
  %v249 = vtanh.pop %v230
  %v250 = vmul.f32 %v246, 0.0
  %v251 = vmul.f32 %v244, %v249
  %v252 = vadd.f32 %v250, %v251
  %v253 = vtanh.pop %v252
  %v254 = vmul.f32 %v248, %v253
  %s255 = scalar_lea.vmem %s0, 32
  %v256 = vld [vmem:[%s255] sm:$0xff]
  %v257 = vld [vmem:[%s255 + $0x8] sm:$0xff]
  %v258 = vld [vmem:[%s255 + $0x10] sm:$0xff]
  %v259 = vld [vmem:[%s255 + $0x18] sm:$0xff]
  %260 = vmatprep.subr.mxu0 %v82
  %261 = vmatpush1.msra.mxu0 %v81
  %262 = vmatprep.subr.mxu0 %v78
  %263 = vmatpush1.msra.mxu0 %v77
  %264 = vmatprep.subr.mxu0 %v74
  %265 = vmatpush1.msra.mxu0 %v73
  %266 = vmatprep.subr.mxu0 %v70
  %267 = vmatpush1.msra.mxu0 %v69
  %268 = vmatprep.subr.mxu0 %v66
  %269 = vmatpush1.msra.mxu0 %v65
  %270 = vmatprep.subr.mxu0 %v62
  %271 = vmatpush1.msra.mxu0 %v61
  %272 = vmatprep.subr.mxu0 %v58
  %273 = vmatpush1.msra.mxu0 %v57
  %274 = vmatprep.subr.mxu0 %v54
  %275 = vmatpush1.msra.mxu0 %v53
  %276 = vmatprep.subr.mxu0 %v50
  %277 = vmatpush1.msra.mxu0 %v49
  %278 = vmatprep.subr.mxu0 %v46
  %279 = vmatpush1.msra.mxu0 %v45
  %280 = vmatprep.subr.mxu0 %v42
  %281 = vmatpush1.msra.mxu0 %v41
  %282 = vmatprep.subr.mxu0 %v38
  %283 = vmatpush1.msra.mxu0 %v37
  %284 = vmatprep.subr.mxu0 %v34
  %285 = vmatpush1.msra.mxu0 %v33
  %286 = vmatprep.subr.mxu0 %v30
  %287 = vmatpush1.msra.mxu0 %v29
  %288 = vmatprep.subr.mxu0 %v26
  %289 = vmatpush1.msra.mxu0 %v25
  %290 = vmatprep.subr.mxu0 %v22
  %291 = vmatpush1.msra.mxu0 %v21
  %292 = vmatprep.subr.mxu0 0.0
  %293 = vmatpush2.msra.mxu0 0.0
  %294 = vmatprep.subr.mxu0 0.0
  %295 = vmatpush2.msra.mxu0 0.0
  %296 = vmatprep.subr.mxu0 0.0
  %297 = vmatpush2.msra.mxu0 0.0
  %298 = vmatprep.subr.mxu0 0.0
  %299 = vmatpush2.msra.mxu0 0.0
  %300 = vmatprep.subr.mxu0 0.0
  %301 = vmatpush2.msra.mxu0 0.0
  %302 = vmatprep.subr.mxu0 0.0
  %303 = vmatpush2.msra.mxu0 0.0
  %304 = vmatprep.subr.mxu0 0.0
  %305 = vmatpush2.msra.mxu0 0.0
  %306 = vmatprep.subr.mxu0 0.0
  %307 = vmatpush2.msra.mxu0 0.0
  %308 = vmatprep.subr.mxu0 0.0
  %309 = vmatpush2.msra.mxu0 0.0
  %310 = vmatprep.subr.mxu0 0.0
  %311 = vmatpush2.msra.mxu0 0.0
  %312 = vmatprep.subr.mxu0 0.0
  %313 = vmatpush2.msra.mxu0 0.0
  %314 = vmatprep.subr.mxu0 0.0
  %315 = vmatpush2.msra.mxu0 0.0
  %316 = vmatprep.subr.mxu0 0.0
  %317 = vmatpush2.msra.mxu0 0.0
  %318 = vmatprep.subr.mxu0 0.0
  %319 = vmatpush2.msra.mxu0 0.0
  %320 = vmatprep.subr.mxu0 0.0
  %321 = vmatpush2.msra.mxu0 0.0
  %322 = vmatprep.subr.mxu0 0.0
  %323 = vmatpush2.msra.mxu0 0.0
  %324 = vmatprep.mubr.f32.mxu0 0.0
  %325 = vmatmul.mubr.f32.gmra.mxu0 %v254
  %v326 = vpop.f32.mrf.mxu0
  %v327 = vadd.f32 0.0, %v326
  %v328 = vpop.f32.mrf.mxu0
  %v329 = vadd.f32 0.0, %v328
  %330 = vdwg.mxu0
  %331 = vmatprep.subr.mxu0 %v84
  %332 = vmatpush1.msra.mxu0 %v83
  %333 = vmatprep.subr.mxu0 %v80
  %334 = vmatpush1.msra.mxu0 %v79
  %335 = vmatprep.subr.mxu0 %v76
  %336 = vmatpush1.msra.mxu0 %v75
  %337 = vmatprep.subr.mxu0 %v72
  %338 = vmatpush1.msra.mxu0 %v71
  %339 = vmatprep.subr.mxu0 %v68
  %340 = vmatpush1.msra.mxu0 %v67
  %341 = vmatprep.subr.mxu0 %v64
  %342 = vmatpush1.msra.mxu0 %v63
  %343 = vmatprep.subr.mxu0 %v60
  %344 = vmatpush1.msra.mxu0 %v59
  %345 = vmatprep.subr.mxu0 %v56
  %346 = vmatpush1.msra.mxu0 %v55
  %347 = vmatprep.subr.mxu0 %v52
  %348 = vmatpush1.msra.mxu0 %v51
  %349 = vmatprep.subr.mxu0 %v48
  %350 = vmatpush1.msra.mxu0 %v47
  %351 = vmatprep.subr.mxu0 %v44
  %352 = vmatpush1.msra.mxu0 %v43
  %353 = vmatprep.subr.mxu0 %v40
  %354 = vmatpush1.msra.mxu0 %v39
  %355 = vmatprep.subr.mxu0 %v36
  %356 = vmatpush1.msra.mxu0 %v35
  %357 = vmatprep.subr.mxu0 %v32
  %358 = vmatpush1.msra.mxu0 %v31
  %359 = vmatprep.subr.mxu0 %v28
  %360 = vmatpush1.msra.mxu0 %v27
  %361 = vmatprep.subr.mxu0 %v24
  %362 = vmatpush1.msra.mxu0 %v23
  %363 = vmatprep.subr.mxu0 0.0
  %364 = vmatpush2.msra.mxu0 0.0
  %365 = vmatprep.subr.mxu0 0.0
  %366 = vmatpush2.msra.mxu0 0.0
  %367 = vmatprep.subr.mxu0 0.0
  %368 = vmatpush2.msra.mxu0 0.0
  %369 = vmatprep.subr.mxu0 0.0
  %370 = vmatpush2.msra.mxu0 0.0
  %371 = vmatprep.subr.mxu0 0.0
  %372 = vmatpush2.msra.mxu0 0.0
  %373 = vmatprep.subr.mxu0 0.0
  %374 = vmatpush2.msra.mxu0 0.0
  %375 = vmatprep.subr.mxu0 0.0
  %376 = vmatpush2.msra.mxu0 0.0
  %377 = vmatprep.subr.mxu0 0.0
  %378 = vmatpush2.msra.mxu0 0.0
  %379 = vmatprep.subr.mxu0 0.0
  %380 = vmatpush2.msra.mxu0 0.0
  %381 = vmatprep.subr.mxu0 0.0
  %382 = vmatpush2.msra.mxu0 0.0
  %383 = vmatprep.subr.mxu0 0.0
  %384 = vmatpush2.msra.mxu0 0.0
  %385 = vmatprep.subr.mxu0 0.0
  %386 = vmatpush2.msra.mxu0 0.0
  %387 = vmatprep.subr.mxu0 0.0
  %388 = vmatpush2.msra.mxu0 0.0
  %389 = vmatprep.subr.mxu0 0.0
  %390 = vmatpush2.msra.mxu0 0.0
  %391 = vmatprep.subr.mxu0 0.0
  %392 = vmatpush2.msra.mxu0 0.0
  %393 = vmatprep.subr.mxu0 0.0
  %394 = vmatpush2.msra.mxu0 0.0
  %395 = vmatprep.mubr.f32.mxu0 0.0
  %396 = vmatmul.mubr.f32.gmra.mxu0 %v254
  %v397 = vpop.f32.mrf.mxu0
  %v398 = vadd.f32 0.0, %v397
  %v399 = vpop.f32.mrf.mxu0
  %v400 = vadd.f32 0.0, %v399
  %401 = vdwg.mxu0
  %v402 = vadd.f32 %v256, %v327
  %v403 = vadd.f32 %v257, %v329
  %v404 = vadd.f32 %v258, %v398
  %v405 = vadd.f32 %v259, %v400
  %v406 = vxor.u32 %v402, 2147483648
  %v407 = vxor.u32 %v403, 2147483648
  %v408 = vxor.u32 %v404, 2147483648
  %v409 = vmul.f32 %v406, 1.442695
  %v410 = vpow.pop %v409
  %v411 = vmul.f32 %v407, 1.442695
  %v412 = vpow.pop %v411
  %v413 = vmul.f32 %v408, 1.442695
  %v414 = vpow.pop %v413
  %v415 = vadd.f32 %v410, 1.0
  %v416 = vadd.f32 %v412, 1.0
  %v417 = vadd.f32 %v414, 1.0
  %v418 = vrcp.pop %v415
  %v419 = vmul.f32 1.0, %v418
  %v420 = vrcp.pop %v416
  %v421 = vmul.f32 1.0, %v420
  %v422 = vrcp.pop %v417
  %v423 = vmul.f32 1.0, %v422
  %v424 = vtanh.pop %v405
  %v425 = vmul.f32 %v421, %v252
  %v426 = vmul.f32 %v419, %v424
  %v427 = vadd.f32 %v425, %v426
  %v428 = vtanh.pop %v427
  %v429 = vmul.f32 %v423, %v428
  %s430 = scalar_lea.vmem %s0, 64
  %v431 = vld [vmem:[%s430] sm:$0xff]
  %v432 = vld [vmem:[%s430 + $0x8] sm:$0xff]
  %v433 = vld [vmem:[%s430 + $0x10] sm:$0xff]
  %v434 = vld [vmem:[%s430 + $0x18] sm:$0xff]
  %435 = vmatprep.subr.mxu0 %v82
  %436 = vmatpush1.msra.mxu0 %v81
  %437 = vmatprep.subr.mxu0 %v78
  %438 = vmatpush1.msra.mxu0 %v77
  %439 = vmatprep.subr.mxu0 %v74
  %440 = vmatpush1.msra.mxu0 %v73
  %441 = vmatprep.subr.mxu0 %v70
  %442 = vmatpush1.msra.mxu0 %v69
  %443 = vmatprep.subr.mxu0 %v66
  %444 = vmatpush1.msra.mxu0 %v65
  %445 = vmatprep.subr.mxu0 %v62
  %446 = vmatpush1.msra.mxu0 %v61
  %447 = vmatprep.subr.mxu0 %v58
  %448 = vmatpush1.msra.mxu0 %v57
  %449 = vmatprep.subr.mxu0 %v54
  %450 = vmatpush1.msra.mxu0 %v53
  %451 = vmatprep.subr.mxu0 %v50
  %452 = vmatpush1.msra.mxu0 %v49
  %453 = vmatprep.subr.mxu0 %v46
  %454 = vmatpush1.msra.mxu0 %v45
  %455 = vmatprep.subr.mxu0 %v42
  %456 = vmatpush1.msra.mxu0 %v41
  %457 = vmatprep.subr.mxu0 %v38
  %458 = vmatpush1.msra.mxu0 %v37
  %459 = vmatprep.subr.mxu0 %v34
  %460 = vmatpush1.msra.mxu0 %v33
  %461 = vmatprep.subr.mxu0 %v30
  %462 = vmatpush1.msra.mxu0 %v29
  %463 = vmatprep.subr.mxu0 %v26
  %464 = vmatpush1.msra.mxu0 %v25
  %465 = vmatprep.subr.mxu0 %v22
  %466 = vmatpush1.msra.mxu0 %v21
  %467 = vmatprep.subr.mxu0 0.0
  %468 = vmatpush2.msra.mxu0 0.0
  %469 = vmatprep.subr.mxu0 0.0
  %470 = vmatpush2.msra.mxu0 0.0
  %471 = vmatprep.subr.mxu0 0.0
  %472 = vmatpush2.msra.mxu0 0.0
  %473 = vmatprep.subr.mxu0 0.0
  %474 = vmatpush2.msra.mxu0 0.0
  %475 = vmatprep.subr.mxu0 0.0
  %476 = vmatpush2.msra.mxu0 0.0
  %477 = vmatprep.subr.mxu0 0.0
  %478 = vmatpush2.msra.mxu0 0.0
  %479 = vmatprep.subr.mxu0 0.0
  %480 = vmatpush2.msra.mxu0 0.0
  %481 = vmatprep.subr.mxu0 0.0
  %482 = vmatpush2.msra.mxu0 0.0
  %483 = vmatprep.subr.mxu0 0.0
  %484 = vmatpush2.msra.mxu0 0.0
  %485 = vmatprep.subr.mxu0 0.0
  %486 = vmatpush2.msra.mxu0 0.0
  %487 = vmatprep.subr.mxu0 0.0
  %488 = vmatpush2.msra.mxu0 0.0
  %489 = vmatprep.subr.mxu0 0.0
  %490 = vmatpush2.msra.mxu0 0.0
  %491 = vmatprep.subr.mxu0 0.0
  %492 = vmatpush2.msra.mxu0 0.0
  %493 = vmatprep.subr.mxu0 0.0
  %494 = vmatpush2.msra.mxu0 0.0
  %495 = vmatprep.subr.mxu0 0.0
  %496 = vmatpush2.msra.mxu0 0.0
  %497 = vmatprep.subr.mxu0 0.0
  %498 = vmatpush2.msra.mxu0 0.0
  %499 = vmatprep.mubr.f32.mxu0 0.0
  %500 = vmatmul.mubr.f32.gmra.mxu0 %v429
  %v501 = vpop.f32.mrf.mxu0
  %v502 = vadd.f32 0.0, %v501
  %v503 = vpop.f32.mrf.mxu0
  %v504 = vadd.f32 0.0, %v503
  %505 = vdwg.mxu0
  %506 = vmatprep.subr.mxu0 %v84
  %507 = vmatpush1.msra.mxu0 %v83
  %508 = vmatprep.subr.mxu0 %v80
  %509 = vmatpush1.msra.mxu0 %v79
  %510 = vmatprep.subr.mxu0 %v76
  %511 = vmatpush1.msra.mxu0 %v75
  %512 = vmatprep.subr.mxu0 %v72
  %513 = vmatpush1.msra.mxu0 %v71
  %514 = vmatprep.subr.mxu0 %v68
  %515 = vmatpush1.msra.mxu0 %v67
  %516 = vmatprep.subr.mxu0 %v64
  %517 = vmatpush1.msra.mxu0 %v63
  %518 = vmatprep.subr.mxu0 %v60
  %519 = vmatpush1.msra.mxu0 %v59
  %520 = vmatprep.subr.mxu0 %v56
  %521 = vmatpush1.msra.mxu0 %v55
  %522 = vmatprep.subr.mxu0 %v52
  %523 = vmatpush1.msra.mxu0 %v51
  %524 = vmatprep.subr.mxu0 %v48
  %525 = vmatpush1.msra.mxu0 %v47
  %526 = vmatprep.subr.mxu0 %v44
  %527 = vmatpush1.msra.mxu0 %v43
  %528 = vmatprep.subr.mxu0 %v40
  %529 = vmatpush1.msra.mxu0 %v39
  %530 = vmatprep.subr.mxu0 %v36
  %531 = vmatpush1.msra.mxu0 %v35
  %532 = vmatprep.subr.mxu0 %v32
  %533 = vmatpush1.msra.mxu0 %v31
  %534 = vmatprep.subr.mxu0 %v28
  %535 = vmatpush1.msra.mxu0 %v27
  %536 = vmatprep.subr.mxu0 %v24
  %537 = vmatpush1.msra.mxu0 %v23
  %538 = vmatprep.subr.mxu0 0.0
  %539 = vmatpush2.msra.mxu0 0.0
  %540 = vmatprep.subr.mxu0 0.0
  %541 = vmatpush2.msra.mxu0 0.0
  %542 = vmatprep.subr.mxu0 0.0
  %543 = vmatpush2.msra.mxu0 0.0
  %544 = vmatprep.subr.mxu0 0.0
  %545 = vmatpush2.msra.mxu0 0.0
  %546 = vmatprep.subr.mxu0 0.0
  %547 = vmatpush2.msra.mxu0 0.0
  %548 = vmatprep.subr.mxu0 0.0
  %549 = vmatpush2.msra.mxu0 0.0
  %550 = vmatprep.subr.mxu0 0.0
  %551 = vmatpush2.msra.mxu0 0.0
  %552 = vmatprep.subr.mxu0 0.0
  %553 = vmatpush2.msra.mxu0 0.0
  %554 = vmatprep.subr.mxu0 0.0
  %555 = vmatpush2.msra.mxu0 0.0
  %556 = vmatprep.subr.mxu0 0.0
  %557 = vmatpush2.msra.mxu0 0.0
  %558 = vmatprep.subr.mxu0 0.0
  %559 = vmatpush2.msra.mxu0 0.0
  %560 = vmatprep.subr.mxu0 0.0
  %561 = vmatpush2.msra.mxu0 0.0
  %562 = vmatprep.subr.mxu0 0.0
  %563 = vmatpush2.msra.mxu0 0.0
  %564 = vmatprep.subr.mxu0 0.0
  %565 = vmatpush2.msra.mxu0 0.0
  %566 = vmatprep.subr.mxu0 0.0
  %567 = vmatpush2.msra.mxu0 0.0
  %568 = vmatprep.subr.mxu0 0.0
  %569 = vmatpush2.msra.mxu0 0.0
  %570 = vmatprep.mubr.f32.mxu0 0.0
  %571 = vmatmul.mubr.f32.gmra.mxu0 %v429
  %v572 = vpop.f32.mrf.mxu0
  %v573 = vadd.f32 0.0, %v572
  %v574 = vpop.f32.mrf.mxu0
  %v575 = vadd.f32 0.0, %v574
  %576 = vdwg.mxu0
  %v577 = vadd.f32 %v431, %v502
  %v578 = vadd.f32 %v432, %v504
  %v579 = vadd.f32 %v433, %v573
  %v580 = vadd.f32 %v434, %v575
  %v581 = vxor.u32 %v577, 2147483648
  %v582 = vxor.u32 %v578, 2147483648
  %v583 = vxor.u32 %v579, 2147483648
  %v584 = vmul.f32 %v581, 1.442695
  %v585 = vpow.pop %v584
  %v586 = vmul.f32 %v582, 1.442695
  %v587 = vpow.pop %v586
  %v588 = vmul.f32 %v583, 1.442695
  %v589 = vpow.pop %v588
  %v590 = vadd.f32 %v585, 1.0
  %v591 = vadd.f32 %v587, 1.0
  %v592 = vadd.f32 %v589, 1.0
  %v593 = vrcp.pop %v590
  %v594 = vmul.f32 1.0, %v593
  %v595 = vrcp.pop %v591
  %v596 = vmul.f32 1.0, %v595
  %v597 = vrcp.pop %v592
  %v598 = vmul.f32 1.0, %v597
  %v599 = vtanh.pop %v580
  %v600 = vmul.f32 %v596, %v427
  %v601 = vmul.f32 %v594, %v599
  %v602 = vadd.f32 %v600, %v601
  %v603 = vtanh.pop %v602
  %v604 = vmul.f32 %v598, %v603
  %s605 = scalar_lea.vmem %s0, 96
  %v606 = vld [vmem:[%s605] sm:$0xff]
  %v607 = vld [vmem:[%s605 + $0x8] sm:$0xff]
  %v608 = vld [vmem:[%s605 + $0x10] sm:$0xff]
  %v609 = vld [vmem:[%s605 + $0x18] sm:$0xff]
  %610 = vmatprep.subr.mxu0 %v82
  %611 = vmatpush1.msra.mxu0 %v81
  %612 = vmatprep.subr.mxu0 %v78
  %613 = vmatpush1.msra.mxu0 %v77
  %614 = vmatprep.subr.mxu0 %v74
  %615 = vmatpush1.msra.mxu0 %v73
  %616 = vmatprep.subr.mxu0 %v70
  %617 = vmatpush1.msra.mxu0 %v69
  %618 = vmatprep.subr.mxu0 %v66
  %619 = vmatpush1.msra.mxu0 %v65
  %620 = vmatprep.subr.mxu0 %v62
  %621 = vmatpush1.msra.mxu0 %v61
  %622 = vmatprep.subr.mxu0 %v58
  %623 = vmatpush1.msra.mxu0 %v57
  %624 = vmatprep.subr.mxu0 %v54
  %625 = vmatpush1.msra.mxu0 %v53
  %626 = vmatprep.subr.mxu0 %v50
  %627 = vmatpush1.msra.mxu0 %v49
  %628 = vmatprep.subr.mxu0 %v46
  %629 = vmatpush1.msra.mxu0 %v45
  %630 = vmatprep.subr.mxu0 %v42
  %631 = vmatpush1.msra.mxu0 %v41
  %632 = vmatprep.subr.mxu0 %v38
  %633 = vmatpush1.msra.mxu0 %v37
  %634 = vmatprep.subr.mxu0 %v34
  %635 = vmatpush1.msra.mxu0 %v33
  %636 = vmatprep.subr.mxu0 %v30
  %637 = vmatpush1.msra.mxu0 %v29
  %638 = vmatprep.subr.mxu0 %v26
  %639 = vmatpush1.msra.mxu0 %v25
  %640 = vmatprep.subr.mxu0 %v22
  %641 = vmatpush1.msra.mxu0 %v21
  %642 = vmatprep.subr.mxu0 0.0
  %643 = vmatpush2.msra.mxu0 0.0
  %644 = vmatprep.subr.mxu0 0.0
  %645 = vmatpush2.msra.mxu0 0.0
  %646 = vmatprep.subr.mxu0 0.0
  %647 = vmatpush2.msra.mxu0 0.0
  %648 = vmatprep.subr.mxu0 0.0
  %649 = vmatpush2.msra.mxu0 0.0
  %650 = vmatprep.subr.mxu0 0.0
  %651 = vmatpush2.msra.mxu0 0.0
  %652 = vmatprep.subr.mxu0 0.0
  %653 = vmatpush2.msra.mxu0 0.0
  %654 = vmatprep.subr.mxu0 0.0
  %655 = vmatpush2.msra.mxu0 0.0
  %656 = vmatprep.subr.mxu0 0.0
  %657 = vmatpush2.msra.mxu0 0.0
  %658 = vmatprep.subr.mxu0 0.0
  %659 = vmatpush2.msra.mxu0 0.0
  %660 = vmatprep.subr.mxu0 0.0
  %661 = vmatpush2.msra.mxu0 0.0
  %662 = vmatprep.subr.mxu0 0.0
  %663 = vmatpush2.msra.mxu0 0.0
  %664 = vmatprep.subr.mxu0 0.0
  %665 = vmatpush2.msra.mxu0 0.0
  %666 = vmatprep.subr.mxu0 0.0
  %667 = vmatpush2.msra.mxu0 0.0
  %668 = vmatprep.subr.mxu0 0.0
  %669 = vmatpush2.msra.mxu0 0.0
  %670 = vmatprep.subr.mxu0 0.0
  %671 = vmatpush2.msra.mxu0 0.0
  %672 = vmatprep.subr.mxu0 0.0
  %673 = vmatpush2.msra.mxu0 0.0
  %674 = vmatprep.mubr.f32.mxu0 0.0
  %675 = vmatmul.mubr.f32.gmra.mxu0 %v604
  %v676 = vpop.f32.mrf.mxu0
  %v677 = vadd.f32 0.0, %v676
  %v678 = vpop.f32.mrf.mxu0
  %v679 = vadd.f32 0.0, %v678
  %680 = vdwg.mxu0
  %681 = vmatprep.subr.mxu0 %v84
  %682 = vmatpush1.msra.mxu0 %v83
  %683 = vmatprep.subr.mxu0 %v80
  %684 = vmatpush1.msra.mxu0 %v79
  %685 = vmatprep.subr.mxu0 %v76
  %686 = vmatpush1.msra.mxu0 %v75
  %687 = vmatprep.subr.mxu0 %v72
  %688 = vmatpush1.msra.mxu0 %v71
  %689 = vmatprep.subr.mxu0 %v68
  %690 = vmatpush1.msra.mxu0 %v67
  %691 = vmatprep.subr.mxu0 %v64
  %692 = vmatpush1.msra.mxu0 %v63
  %693 = vmatprep.subr.mxu0 %v60
  %694 = vmatpush1.msra.mxu0 %v59
  %695 = vmatprep.subr.mxu0 %v56
  %696 = vmatpush1.msra.mxu0 %v55
  %697 = vmatprep.subr.mxu0 %v52
  %698 = vmatpush1.msra.mxu0 %v51
  %699 = vmatprep.subr.mxu0 %v48
  %700 = vmatpush1.msra.mxu0 %v47
  %701 = vmatprep.subr.mxu0 %v44
  %702 = vmatpush1.msra.mxu0 %v43
  %703 = vmatprep.subr.mxu0 %v40
  %704 = vmatpush1.msra.mxu0 %v39
  %705 = vmatprep.subr.mxu0 %v36
  %706 = vmatpush1.msra.mxu0 %v35
  %707 = vmatprep.subr.mxu0 %v32
  %708 = vmatpush1.msra.mxu0 %v31
  %709 = vmatprep.subr.mxu0 %v28
  %710 = vmatpush1.msra.mxu0 %v27
  %711 = vmatprep.subr.mxu0 %v24
  %712 = vmatpush1.msra.mxu0 %v23
  %713 = vmatprep.subr.mxu0 0.0
  %714 = vmatpush2.msra.mxu0 0.0
  %715 = vmatprep.subr.mxu0 0.0
  %716 = vmatpush2.msra.mxu0 0.0
  %717 = vmatprep.subr.mxu0 0.0
  %718 = vmatpush2.msra.mxu0 0.0
  %719 = vmatprep.subr.mxu0 0.0
  %720 = vmatpush2.msra.mxu0 0.0
  %721 = vmatprep.subr.mxu0 0.0
  %722 = vmatpush2.msra.mxu0 0.0
  %723 = vmatprep.subr.mxu0 0.0
  %724 = vmatpush2.msra.mxu0 0.0
  %725 = vmatprep.subr.mxu0 0.0
  %726 = vmatpush2.msra.mxu0 0.0
  %727 = vmatprep.subr.mxu0 0.0
  %728 = vmatpush2.msra.mxu0 0.0
  %729 = vmatprep.subr.mxu0 0.0
  %730 = vmatpush2.msra.mxu0 0.0
  %731 = vmatprep.subr.mxu0 0.0
  %732 = vmatpush2.msra.mxu0 0.0
  %733 = vmatprep.subr.mxu0 0.0
  %734 = vmatpush2.msra.mxu0 0.0
  %735 = vmatprep.subr.mxu0 0.0
  %736 = vmatpush2.msra.mxu0 0.0
  %737 = vmatprep.subr.mxu0 0.0
  %738 = vmatpush2.msra.mxu0 0.0
  %739 = vmatprep.subr.mxu0 0.0
  %740 = vmatpush2.msra.mxu0 0.0
  %741 = vmatprep.subr.mxu0 0.0
  %742 = vmatpush2.msra.mxu0 0.0
  %743 = vmatprep.subr.mxu0 0.0
  %744 = vmatpush2.msra.mxu0 0.0
  %745 = vmatprep.mubr.f32.mxu0 0.0
  %746 = vmatmul.mubr.f32.gmra.mxu0 %v604
  %v747 = vpop.f32.mrf.mxu0
  %v748 = vadd.f32 0.0, %v747
  %v749 = vpop.f32.mrf.mxu0
  %v750 = vadd.f32 0.0, %v749
  %751 = vdwg.mxu0
  %v752 = vadd.f32 %v606, %v677
  %v753 = vadd.f32 %v607, %v679
  %v754 = vadd.f32 %v608, %v748
  %v755 = vadd.f32 %v609, %v750
  %v756 = vxor.u32 %v752, 2147483648
  %v757 = vxor.u32 %v753, 2147483648
  %v758 = vxor.u32 %v754, 2147483648
  %v759 = vmul.f32 %v756, 1.442695
  %v760 = vpow.pop %v759
  %v761 = vmul.f32 %v757, 1.442695
  %v762 = vpow.pop %v761
  %v763 = vmul.f32 %v758, 1.442695
  %v764 = vpow.pop %v763
  %v765 = vadd.f32 %v760, 1.0
  %v766 = vadd.f32 %v762, 1.0
  %v767 = vadd.f32 %v764, 1.0
  %v768 = vrcp.pop %v765
  %v769 = vmul.f32 1.0, %v768
  %v770 = vrcp.pop %v766
  %v771 = vmul.f32 1.0, %v770
  %v772 = vrcp.pop %v767
  %v773 = vmul.f32 1.0, %v772
  %v774 = vtanh.pop %v755
  %v775 = vmul.f32 %v771, %v602
  %v776 = vmul.f32 %v769, %v774
  %v777 = vadd.f32 %v775, %v776
  %v778 = vtanh.pop %v777
  %v779 = vmul.f32 %v773, %v778
  %s780 = scalar_lea.vmem %s0, 128
  %v781 = vld [vmem:[%s780] sm:$0xff]
  %v782 = vld [vmem:[%s780 + $0x8] sm:$0xff]
  %v783 = vld [vmem:[%s780 + $0x10] sm:$0xff]
  %v784 = vld [vmem:[%s780 + $0x18] sm:$0xff]
  %785 = vmatprep.subr.mxu0 %v82
  %786 = vmatpush1.msra.mxu0 %v81
  %787 = vmatprep.subr.mxu0 %v78
  %788 = vmatpush1.msra.mxu0 %v77
  %789 = vmatprep.subr.mxu0 %v74
  %790 = vmatpush1.msra.mxu0 %v73
  %791 = vmatprep.subr.mxu0 %v70
  %792 = vmatpush1.msra.mxu0 %v69
  %793 = vmatprep.subr.mxu0 %v66
  %794 = vmatpush1.msra.mxu0 %v65
  %795 = vmatprep.subr.mxu0 %v62
  %796 = vmatpush1.msra.mxu0 %v61
  %797 = vmatprep.subr.mxu0 %v58
  %798 = vmatpush1.msra.mxu0 %v57
  %799 = vmatprep.subr.mxu0 %v54
  %800 = vmatpush1.msra.mxu0 %v53
  %801 = vmatprep.subr.mxu0 %v50
  %802 = vmatpush1.msra.mxu0 %v49
  %803 = vmatprep.subr.mxu0 %v46
  %804 = vmatpush1.msra.mxu0 %v45
  %805 = vmatprep.subr.mxu0 %v42
  %806 = vmatpush1.msra.mxu0 %v41
  %807 = vmatprep.subr.mxu0 %v38
  %808 = vmatpush1.msra.mxu0 %v37
  %809 = vmatprep.subr.mxu0 %v34
  %810 = vmatpush1.msra.mxu0 %v33
  %811 = vmatprep.subr.mxu0 %v30
  %812 = vmatpush1.msra.mxu0 %v29
  %813 = vmatprep.subr.mxu0 %v26
  %814 = vmatpush1.msra.mxu0 %v25
  %815 = vmatprep.subr.mxu0 %v22
  %816 = vmatpush1.msra.mxu0 %v21
  %817 = vmatprep.subr.mxu0 0.0
  %818 = vmatpush2.msra.mxu0 0.0
  %819 = vmatprep.subr.mxu0 0.0
  %820 = vmatpush2.msra.mxu0 0.0
  %821 = vmatprep.subr.mxu0 0.0
  %822 = vmatpush2.msra.mxu0 0.0
  %823 = vmatprep.subr.mxu0 0.0
  %824 = vmatpush2.msra.mxu0 0.0
  %825 = vmatprep.subr.mxu0 0.0
  %826 = vmatpush2.msra.mxu0 0.0
  %827 = vmatprep.subr.mxu0 0.0
  %828 = vmatpush2.msra.mxu0 0.0
  %829 = vmatprep.subr.mxu0 0.0
  %830 = vmatpush2.msra.mxu0 0.0
  %831 = vmatprep.subr.mxu0 0.0
  %832 = vmatpush2.msra.mxu0 0.0
  %833 = vmatprep.subr.mxu0 0.0
  %834 = vmatpush2.msra.mxu0 0.0
  %835 = vmatprep.subr.mxu0 0.0
  %836 = vmatpush2.msra.mxu0 0.0
  %837 = vmatprep.subr.mxu0 0.0
  %838 = vmatpush2.msra.mxu0 0.0
  %839 = vmatprep.subr.mxu0 0.0
  %840 = vmatpush2.msra.mxu0 0.0
  %841 = vmatprep.subr.mxu0 0.0
  %842 = vmatpush2.msra.mxu0 0.0
  %843 = vmatprep.subr.mxu0 0.0
  %844 = vmatpush2.msra.mxu0 0.0
  %845 = vmatprep.subr.mxu0 0.0
  %846 = vmatpush2.msra.mxu0 0.0
  %847 = vmatprep.subr.mxu0 0.0
  %848 = vmatpush2.msra.mxu0 0.0
  %849 = vmatprep.mubr.f32.mxu0 0.0
  %850 = vmatmul.mubr.f32.gmra.mxu0 %v779
  %v851 = vpop.f32.mrf.mxu0
  %v852 = vadd.f32 0.0, %v851
  %v853 = vpop.f32.mrf.mxu0
  %v854 = vadd.f32 0.0, %v853
  %855 = vdwg.mxu0
  %856 = vmatprep.subr.mxu0 %v84
  %857 = vmatpush1.msra.mxu0 %v83
  %858 = vmatprep.subr.mxu0 %v80
  %859 = vmatpush1.msra.mxu0 %v79
  %860 = vmatprep.subr.mxu0 %v76
  %861 = vmatpush1.msra.mxu0 %v75
  %862 = vmatprep.subr.mxu0 %v72
  %863 = vmatpush1.msra.mxu0 %v71
  %864 = vmatprep.subr.mxu0 %v68
  %865 = vmatpush1.msra.mxu0 %v67
  %866 = vmatprep.subr.mxu0 %v64
  %867 = vmatpush1.msra.mxu0 %v63
  %868 = vmatprep.subr.mxu0 %v60
  %869 = vmatpush1.msra.mxu0 %v59
  %870 = vmatprep.subr.mxu0 %v56
  %871 = vmatpush1.msra.mxu0 %v55
  %872 = vmatprep.subr.mxu0 %v52
  %873 = vmatpush1.msra.mxu0 %v51
  %874 = vmatprep.subr.mxu0 %v48
  %875 = vmatpush1.msra.mxu0 %v47
  %876 = vmatprep.subr.mxu0 %v44
  %877 = vmatpush1.msra.mxu0 %v43
  %878 = vmatprep.subr.mxu0 %v40
  %879 = vmatpush1.msra.mxu0 %v39
  %880 = vmatprep.subr.mxu0 %v36
  %881 = vmatpush1.msra.mxu0 %v35
  %882 = vmatprep.subr.mxu0 %v32
  %883 = vmatpush1.msra.mxu0 %v31
  %884 = vmatprep.subr.mxu0 %v28
  %885 = vmatpush1.msra.mxu0 %v27
  %886 = vmatprep.subr.mxu0 %v24
  %887 = vmatpush1.msra.mxu0 %v23
  %888 = vmatprep.subr.mxu0 0.0
  %889 = vmatpush2.msra.mxu0 0.0
  %890 = vmatprep.subr.mxu0 0.0
  %891 = vmatpush2.msra.mxu0 0.0
  %892 = vmatprep.subr.mxu0 0.0
  %893 = vmatpush2.msra.mxu0 0.0
  %894 = vmatprep.subr.mxu0 0.0
  %895 = vmatpush2.msra.mxu0 0.0
  %896 = vmatprep.subr.mxu0 0.0
  %897 = vmatpush2.msra.mxu0 0.0
  %898 = vmatprep.subr.mxu0 0.0
  %899 = vmatpush2.msra.mxu0 0.0
  %900 = vmatprep.subr.mxu0 0.0
  %901 = vmatpush2.msra.mxu0 0.0
  %902 = vmatprep.subr.mxu0 0.0
  %903 = vmatpush2.msra.mxu0 0.0
  %904 = vmatprep.subr.mxu0 0.0
  %905 = vmatpush2.msra.mxu0 0.0
  %906 = vmatprep.subr.mxu0 0.0
  %907 = vmatpush2.msra.mxu0 0.0
  %908 = vmatprep.subr.mxu0 0.0
  %909 = vmatpush2.msra.mxu0 0.0
  %910 = vmatprep.subr.mxu0 0.0
  %911 = vmatpush2.msra.mxu0 0.0
  %912 = vmatprep.subr.mxu0 0.0
  %913 = vmatpush2.msra.mxu0 0.0
  %914 = vmatprep.subr.mxu0 0.0
  %915 = vmatpush2.msra.mxu0 0.0
  %916 = vmatprep.subr.mxu0 0.0
  %917 = vmatpush2.msra.mxu0 0.0
  %918 = vmatprep.subr.mxu0 0.0
  %919 = vmatpush2.msra.mxu0 0.0
  %920 = vmatprep.mubr.f32.mxu0 0.0
  %921 = vmatmul.mubr.f32.gmra.mxu0 %v779
  %v922 = vpop.f32.mrf.mxu0
  %v923 = vadd.f32 0.0, %v922
  %v924 = vpop.f32.mrf.mxu0
  %v925 = vadd.f32 0.0, %v924
  %926 = vdwg.mxu0
  %v927 = vadd.f32 %v781, %v852
  %v928 = vadd.f32 %v782, %v854
  %v929 = vadd.f32 %v783, %v923
  %v930 = vadd.f32 %v784, %v925
  %v931 = vxor.u32 %v927, 2147483648
  %v932 = vxor.u32 %v928, 2147483648
  %v933 = vxor.u32 %v929, 2147483648
  %v934 = vmul.f32 %v931, 1.442695
  %v935 = vpow.pop %v934
  %v936 = vmul.f32 %v932, 1.442695
  %v937 = vpow.pop %v936
  %v938 = vmul.f32 %v933, 1.442695
  %v939 = vpow.pop %v938
  %v940 = vadd.f32 %v935, 1.0
  %v941 = vadd.f32 %v937, 1.0
  %v942 = vadd.f32 %v939, 1.0
  %v943 = vrcp.pop %v940
  %v944 = vmul.f32 1.0, %v943
  %v945 = vrcp.pop %v941
  %v946 = vmul.f32 1.0, %v945
  %v947 = vrcp.pop %v942
  %v948 = vmul.f32 1.0, %v947
  %v949 = vtanh.pop %v930
  %v950 = vmul.f32 %v946, %v777
  %v951 = vmul.f32 %v944, %v949
  %v952 = vadd.f32 %v950, %v951
  %v953 = vtanh.pop %v952
  %v954 = vmul.f32 %v948, %v953
  %s955 = scalar_lea.vmem %s0, 160
  %v956 = vld [vmem:[%s955] sm:$0xff]
  %v957 = vld [vmem:[%s955 + $0x8] sm:$0xff]
  %v958 = vld [vmem:[%s955 + $0x10] sm:$0xff]
  %v959 = vld [vmem:[%s955 + $0x18] sm:$0xff]
  %960 = vmatprep.subr.mxu0 %v82
  %961 = vmatpush1.msra.mxu0 %v81
  %962 = vmatprep.subr.mxu0 %v78
  %963 = vmatpush1.msra.mxu0 %v77
  %964 = vmatprep.subr.mxu0 %v74
  %965 = vmatpush1.msra.mxu0 %v73
  %966 = vmatprep.subr.mxu0 %v70
  %967 = vmatpush1.msra.mxu0 %v69
  %968 = vmatprep.subr.mxu0 %v66
  %969 = vmatpush1.msra.mxu0 %v65
  %970 = vmatprep.subr.mxu0 %v62
  %971 = vmatpush1.msra.mxu0 %v61
  %972 = vmatprep.subr.mxu0 %v58
  %973 = vmatpush1.msra.mxu0 %v57
  %974 = vmatprep.subr.mxu0 %v54
  %975 = vmatpush1.msra.mxu0 %v53
  %976 = vmatprep.subr.mxu0 %v50
  %977 = vmatpush1.msra.mxu0 %v49
  %978 = vmatprep.subr.mxu0 %v46
  %979 = vmatpush1.msra.mxu0 %v45
  %980 = vmatprep.subr.mxu0 %v42
  %981 = vmatpush1.msra.mxu0 %v41
  %982 = vmatprep.subr.mxu0 %v38
  %983 = vmatpush1.msra.mxu0 %v37
  %984 = vmatprep.subr.mxu0 %v34
  %985 = vmatpush1.msra.mxu0 %v33
  %986 = vmatprep.subr.mxu0 %v30
  %987 = vmatpush1.msra.mxu0 %v29
  %988 = vmatprep.subr.mxu0 %v26
  %989 = vmatpush1.msra.mxu0 %v25
  %990 = vmatprep.subr.mxu0 %v22
  %991 = vmatpush1.msra.mxu0 %v21
  %992 = vmatprep.subr.mxu0 0.0
  %993 = vmatpush2.msra.mxu0 0.0
  %994 = vmatprep.subr.mxu0 0.0
  %995 = vmatpush2.msra.mxu0 0.0
  %996 = vmatprep.subr.mxu0 0.0
  %997 = vmatpush2.msra.mxu0 0.0
  %998 = vmatprep.subr.mxu0 0.0
  %999 = vmatpush2.msra.mxu0 0.0
  %1000 = vmatprep.subr.mxu0 0.0
  %1001 = vmatpush2.msra.mxu0 0.0
  %1002 = vmatprep.subr.mxu0 0.0
  %1003 = vmatpush2.msra.mxu0 0.0
  %1004 = vmatprep.subr.mxu0 0.0
  %1005 = vmatpush2.msra.mxu0 0.0
  %1006 = vmatprep.subr.mxu0 0.0
  %1007 = vmatpush2.msra.mxu0 0.0
  %1008 = vmatprep.subr.mxu0 0.0
  %1009 = vmatpush2.msra.mxu0 0.0
  %1010 = vmatprep.subr.mxu0 0.0
  %1011 = vmatpush2.msra.mxu0 0.0
  %1012 = vmatprep.subr.mxu0 0.0
  %1013 = vmatpush2.msra.mxu0 0.0
  %1014 = vmatprep.subr.mxu0 0.0
  %1015 = vmatpush2.msra.mxu0 0.0
  %1016 = vmatprep.subr.mxu0 0.0
  %1017 = vmatpush2.msra.mxu0 0.0
  %1018 = vmatprep.subr.mxu0 0.0
  %1019 = vmatpush2.msra.mxu0 0.0
  %1020 = vmatprep.subr.mxu0 0.0
  %1021 = vmatpush2.msra.mxu0 0.0
  %1022 = vmatprep.subr.mxu0 0.0
  %1023 = vmatpush2.msra.mxu0 0.0
  %1024 = vmatprep.mubr.f32.mxu0 0.0
  %1025 = vmatmul.mubr.f32.gmra.mxu0 %v954
  %v1026 = vpop.f32.mrf.mxu0
  %v1027 = vadd.f32 0.0, %v1026
  %v1028 = vpop.f32.mrf.mxu0
  %v1029 = vadd.f32 0.0, %v1028
  %1030 = vdwg.mxu0
  %1031 = vmatprep.subr.mxu0 %v84
  %1032 = vmatpush1.msra.mxu0 %v83
  %1033 = vmatprep.subr.mxu0 %v80
  %1034 = vmatpush1.msra.mxu0 %v79
  %1035 = vmatprep.subr.mxu0 %v76
  %1036 = vmatpush1.msra.mxu0 %v75
  %1037 = vmatprep.subr.mxu0 %v72
  %1038 = vmatpush1.msra.mxu0 %v71
  %1039 = vmatprep.subr.mxu0 %v68
  %1040 = vmatpush1.msra.mxu0 %v67
  %1041 = vmatprep.subr.mxu0 %v64
  %1042 = vmatpush1.msra.mxu0 %v63
  %1043 = vmatprep.subr.mxu0 %v60
  %1044 = vmatpush1.msra.mxu0 %v59
  %1045 = vmatprep.subr.mxu0 %v56
  %1046 = vmatpush1.msra.mxu0 %v55
  %1047 = vmatprep.subr.mxu0 %v52
  %1048 = vmatpush1.msra.mxu0 %v51
  %1049 = vmatprep.subr.mxu0 %v48
  %1050 = vmatpush1.msra.mxu0 %v47
  %1051 = vmatprep.subr.mxu0 %v44
  %1052 = vmatpush1.msra.mxu0 %v43
  %1053 = vmatprep.subr.mxu0 %v40
  %1054 = vmatpush1.msra.mxu0 %v39
  %1055 = vmatprep.subr.mxu0 %v36
  %1056 = vmatpush1.msra.mxu0 %v35
  %1057 = vmatprep.subr.mxu0 %v32
  %1058 = vmatpush1.msra.mxu0 %v31
  %1059 = vmatprep.subr.mxu0 %v28
  %1060 = vmatpush1.msra.mxu0 %v27
  %1061 = vmatprep.subr.mxu0 %v24
  %1062 = vmatpush1.msra.mxu0 %v23
  %1063 = vmatprep.subr.mxu0 0.0
  %1064 = vmatpush2.msra.mxu0 0.0
  %1065 = vmatprep.subr.mxu0 0.0
  %1066 = vmatpush2.msra.mxu0 0.0
  %1067 = vmatprep.subr.mxu0 0.0
  %1068 = vmatpush2.msra.mxu0 0.0
  %1069 = vmatprep.subr.mxu0 0.0
  %1070 = vmatpush2.msra.mxu0 0.0
  %1071 = vmatprep.subr.mxu0 0.0
  %1072 = vmatpush2.msra.mxu0 0.0
  %1073 = vmatprep.subr.mxu0 0.0
  %1074 = vmatpush2.msra.mxu0 0.0
  %1075 = vmatprep.subr.mxu0 0.0
  %1076 = vmatpush2.msra.mxu0 0.0
  %1077 = vmatprep.subr.mxu0 0.0
  %1078 = vmatpush2.msra.mxu0 0.0
  %1079 = vmatprep.subr.mxu0 0.0
  %1080 = vmatpush2.msra.mxu0 0.0
  %1081 = vmatprep.subr.mxu0 0.0
  %1082 = vmatpush2.msra.mxu0 0.0
  %1083 = vmatprep.subr.mxu0 0.0
  %1084 = vmatpush2.msra.mxu0 0.0
  %1085 = vmatprep.subr.mxu0 0.0
  %1086 = vmatpush2.msra.mxu0 0.0
  %1087 = vmatprep.subr.mxu0 0.0
  %1088 = vmatpush2.msra.mxu0 0.0
  %1089 = vmatprep.subr.mxu0 0.0
  %1090 = vmatpush2.msra.mxu0 0.0
  %1091 = vmatprep.subr.mxu0 0.0
  %1092 = vmatpush2.msra.mxu0 0.0
  %1093 = vmatprep.subr.mxu0 0.0
  %1094 = vmatpush2.msra.mxu0 0.0
  %1095 = vmatprep.mubr.f32.mxu0 0.0
  %1096 = vmatmul.mubr.f32.gmra.mxu0 %v954
  %v1097 = vpop.f32.mrf.mxu0
  %v1098 = vadd.f32 0.0, %v1097
  %v1099 = vpop.f32.mrf.mxu0
  %v1100 = vadd.f32 0.0, %v1099
  %1101 = vdwg.mxu0
  %v1102 = vadd.f32 %v956, %v1027
  %v1103 = vadd.f32 %v957, %v1029
  %v1104 = vadd.f32 %v958, %v1098
  %v1105 = vadd.f32 %v959, %v1100
  %v1106 = vxor.u32 %v1102, 2147483648
  %v1107 = vxor.u32 %v1103, 2147483648
  %v1108 = vxor.u32 %v1104, 2147483648
  %v1109 = vmul.f32 %v1106, 1.442695
  %v1110 = vpow.pop %v1109
  %v1111 = vmul.f32 %v1107, 1.442695
  %v1112 = vpow.pop %v1111
  %v1113 = vmul.f32 %v1108, 1.442695
  %v1114 = vpow.pop %v1113
  %v1115 = vadd.f32 %v1110, 1.0
  %v1116 = vadd.f32 %v1112, 1.0
  %v1117 = vadd.f32 %v1114, 1.0
  %v1118 = vrcp.pop %v1115
  %v1119 = vmul.f32 1.0, %v1118
  %v1120 = vrcp.pop %v1116
  %v1121 = vmul.f32 1.0, %v1120
  %v1122 = vrcp.pop %v1117
  %v1123 = vmul.f32 1.0, %v1122
  %v1124 = vtanh.pop %v1105
  %v1125 = vmul.f32 %v1121, %v952
  %v1126 = vmul.f32 %v1119, %v1124
  %v1127 = vadd.f32 %v1125, %v1126
  %v1128 = vtanh.pop %v1127
  %v1129 = vmul.f32 %v1123, %v1128
  %s1130 = scalar_lea.vmem %s0, 192
  %v1131 = vld [vmem:[%s1130] sm:$0xff]
  %v1132 = vld [vmem:[%s1130 + $0x8] sm:$0xff]
  %v1133 = vld [vmem:[%s1130 + $0x10] sm:$0xff]
  %v1134 = vld [vmem:[%s1130 + $0x18] sm:$0xff]
  %1135 = vmatprep.subr.mxu0 %v82
  %1136 = vmatpush1.msra.mxu0 %v81
  %1137 = vmatprep.subr.mxu0 %v78
  %1138 = vmatpush1.msra.mxu0 %v77
  %1139 = vmatprep.subr.mxu0 %v74
  %1140 = vmatpush1.msra.mxu0 %v73
  %1141 = vmatprep.subr.mxu0 %v70
  %1142 = vmatpush1.msra.mxu0 %v69
  %1143 = vmatprep.subr.mxu0 %v66
  %1144 = vmatpush1.msra.mxu0 %v65
  %1145 = vmatprep.subr.mxu0 %v62
  %1146 = vmatpush1.msra.mxu0 %v61
  %1147 = vmatprep.subr.mxu0 %v58
  %1148 = vmatpush1.msra.mxu0 %v57
  %1149 = vmatprep.subr.mxu0 %v54
  %1150 = vmatpush1.msra.mxu0 %v53
  %1151 = vmatprep.subr.mxu0 %v50
  %1152 = vmatpush1.msra.mxu0 %v49
  %1153 = vmatprep.subr.mxu0 %v46
  %1154 = vmatpush1.msra.mxu0 %v45
  %1155 = vmatprep.subr.mxu0 %v42
  %1156 = vmatpush1.msra.mxu0 %v41
  %1157 = vmatprep.subr.mxu0 %v38
  %1158 = vmatpush1.msra.mxu0 %v37
  %1159 = vmatprep.subr.mxu0 %v34
  %1160 = vmatpush1.msra.mxu0 %v33
  %1161 = vmatprep.subr.mxu0 %v30
  %1162 = vmatpush1.msra.mxu0 %v29
  %1163 = vmatprep.subr.mxu0 %v26
  %1164 = vmatpush1.msra.mxu0 %v25
  %1165 = vmatprep.subr.mxu0 %v22
  %1166 = vmatpush1.msra.mxu0 %v21
  %1167 = vmatprep.subr.mxu0 0.0
  %1168 = vmatpush2.msra.mxu0 0.0
  %1169 = vmatprep.subr.mxu0 0.0
  %1170 = vmatpush2.msra.mxu0 0.0
  %1171 = vmatprep.subr.mxu0 0.0
  %1172 = vmatpush2.msra.mxu0 0.0
  %1173 = vmatprep.subr.mxu0 0.0
  %1174 = vmatpush2.msra.mxu0 0.0
  %1175 = vmatprep.subr.mxu0 0.0
  %1176 = vmatpush2.msra.mxu0 0.0
  %1177 = vmatprep.subr.mxu0 0.0
  %1178 = vmatpush2.msra.mxu0 0.0
  %1179 = vmatprep.subr.mxu0 0.0
  %1180 = vmatpush2.msra.mxu0 0.0
  %1181 = vmatprep.subr.mxu0 0.0
  %1182 = vmatpush2.msra.mxu0 0.0
  %1183 = vmatprep.subr.mxu0 0.0
  %1184 = vmatpush2.msra.mxu0 0.0
  %1185 = vmatprep.subr.mxu0 0.0
  %1186 = vmatpush2.msra.mxu0 0.0
  %1187 = vmatprep.subr.mxu0 0.0
  %1188 = vmatpush2.msra.mxu0 0.0
  %1189 = vmatprep.subr.mxu0 0.0
  %1190 = vmatpush2.msra.mxu0 0.0
  %1191 = vmatprep.subr.mxu0 0.0
  %1192 = vmatpush2.msra.mxu0 0.0
  %1193 = vmatprep.subr.mxu0 0.0
  %1194 = vmatpush2.msra.mxu0 0.0
  %1195 = vmatprep.subr.mxu0 0.0
  %1196 = vmatpush2.msra.mxu0 0.0
  %1197 = vmatprep.subr.mxu0 0.0
  %1198 = vmatpush2.msra.mxu0 0.0
  %1199 = vmatprep.mubr.f32.mxu0 0.0
  %1200 = vmatmul.mubr.f32.gmra.mxu0 %v1129
  %v1201 = vpop.f32.mrf.mxu0
  %v1202 = vadd.f32 0.0, %v1201
  %v1203 = vpop.f32.mrf.mxu0
  %v1204 = vadd.f32 0.0, %v1203
  %1205 = vdwg.mxu0
  %1206 = vmatprep.subr.mxu0 %v84
  %1207 = vmatpush1.msra.mxu0 %v83
  %1208 = vmatprep.subr.mxu0 %v80
  %1209 = vmatpush1.msra.mxu0 %v79
  %1210 = vmatprep.subr.mxu0 %v76
  %1211 = vmatpush1.msra.mxu0 %v75
  %1212 = vmatprep.subr.mxu0 %v72
  %1213 = vmatpush1.msra.mxu0 %v71
  %1214 = vmatprep.subr.mxu0 %v68
  %1215 = vmatpush1.msra.mxu0 %v67
  %1216 = vmatprep.subr.mxu0 %v64
  %1217 = vmatpush1.msra.mxu0 %v63
  %1218 = vmatprep.subr.mxu0 %v60
  %1219 = vmatpush1.msra.mxu0 %v59
  %1220 = vmatprep.subr.mxu0 %v56
  %1221 = vmatpush1.msra.mxu0 %v55
  %1222 = vmatprep.subr.mxu0 %v52
  %1223 = vmatpush1.msra.mxu0 %v51
  %1224 = vmatprep.subr.mxu0 %v48
  %1225 = vmatpush1.msra.mxu0 %v47
  %1226 = vmatprep.subr.mxu0 %v44
  %1227 = vmatpush1.msra.mxu0 %v43
  %1228 = vmatprep.subr.mxu0 %v40
  %1229 = vmatpush1.msra.mxu0 %v39
  %1230 = vmatprep.subr.mxu0 %v36
  %1231 = vmatpush1.msra.mxu0 %v35
  %1232 = vmatprep.subr.mxu0 %v32
  %1233 = vmatpush1.msra.mxu0 %v31
  %1234 = vmatprep.subr.mxu0 %v28
  %1235 = vmatpush1.msra.mxu0 %v27
  %1236 = vmatprep.subr.mxu0 %v24
  %1237 = vmatpush1.msra.mxu0 %v23
  %1238 = vmatprep.subr.mxu0 0.0
  %1239 = vmatpush2.msra.mxu0 0.0
  %1240 = vmatprep.subr.mxu0 0.0
  %1241 = vmatpush2.msra.mxu0 0.0
  %1242 = vmatprep.subr.mxu0 0.0
  %1243 = vmatpush2.msra.mxu0 0.0
  %1244 = vmatprep.subr.mxu0 0.0
  %1245 = vmatpush2.msra.mxu0 0.0
  %1246 = vmatprep.subr.mxu0 0.0
  %1247 = vmatpush2.msra.mxu0 0.0
  %1248 = vmatprep.subr.mxu0 0.0
  %1249 = vmatpush2.msra.mxu0 0.0
  %1250 = vmatprep.subr.mxu0 0.0
  %1251 = vmatpush2.msra.mxu0 0.0
  %1252 = vmatprep.subr.mxu0 0.0
  %1253 = vmatpush2.msra.mxu0 0.0
  %1254 = vmatprep.subr.mxu0 0.0
  %1255 = vmatpush2.msra.mxu0 0.0
  %1256 = vmatprep.subr.mxu0 0.0
  %1257 = vmatpush2.msra.mxu0 0.0
  %1258 = vmatprep.subr.mxu0 0.0
  %1259 = vmatpush2.msra.mxu0 0.0
  %1260 = vmatprep.subr.mxu0 0.0
  %1261 = vmatpush2.msra.mxu0 0.0
  %1262 = vmatprep.subr.mxu0 0.0
  %1263 = vmatpush2.msra.mxu0 0.0
  %1264 = vmatprep.subr.mxu0 0.0
  %1265 = vmatpush2.msra.mxu0 0.0
  %1266 = vmatprep.subr.mxu0 0.0
  %1267 = vmatpush2.msra.mxu0 0.0
  %1268 = vmatprep.subr.mxu0 0.0
  %1269 = vmatpush2.msra.mxu0 0.0
  %1270 = vmatprep.mubr.f32.mxu0 0.0
  %1271 = vmatmul.mubr.f32.gmra.mxu0 %v1129
  %v1272 = vpop.f32.mrf.mxu0
  %v1273 = vadd.f32 0.0, %v1272
  %v1274 = vpop.f32.mrf.mxu0
  %v1275 = vadd.f32 0.0, %v1274
  %1276 = vdwg.mxu0
  %v1277 = vadd.f32 %v1131, %v1202
  %v1278 = vadd.f32 %v1132, %v1204
  %v1279 = vadd.f32 %v1133, %v1273
  %v1280 = vadd.f32 %v1134, %v1275
  %v1281 = vxor.u32 %v1277, 2147483648
  %v1282 = vxor.u32 %v1278, 2147483648
  %v1283 = vxor.u32 %v1279, 2147483648
  %v1284 = vmul.f32 %v1281, 1.442695
  %v1285 = vpow.pop %v1284
  %v1286 = vmul.f32 %v1282, 1.442695
  %v1287 = vpow.pop %v1286
  %v1288 = vmul.f32 %v1283, 1.442695
  %v1289 = vpow.pop %v1288
  %v1290 = vadd.f32 %v1285, 1.0
  %v1291 = vadd.f32 %v1287, 1.0
  %v1292 = vadd.f32 %v1289, 1.0
  %v1293 = vrcp.pop %v1290
  %v1294 = vmul.f32 1.0, %v1293
  %v1295 = vrcp.pop %v1291
  %v1296 = vmul.f32 1.0, %v1295
  %v1297 = vrcp.pop %v1292
  %v1298 = vmul.f32 1.0, %v1297
  %v1299 = vtanh.pop %v1280
  %v1300 = vmul.f32 %v1296, %v1127
  %v1301 = vmul.f32 %v1294, %v1299
  %v1302 = vadd.f32 %v1300, %v1301
  %v1303 = vtanh.pop %v1302
  %v1304 = vmul.f32 %v1298, %v1303
  %s1305 = scalar_lea.vmem %s0, 224
  %v1306 = vld [vmem:[%s1305] sm:$0xff]
  %v1307 = vld [vmem:[%s1305 + $0x8] sm:$0xff]
  %v1308 = vld [vmem:[%s1305 + $0x10] sm:$0xff]
  %v1309 = vld [vmem:[%s1305 + $0x18] sm:$0xff]
  %1310 = vmatprep.subr.mxu0 %v82
  %1311 = vmatpush1.msra.mxu0 %v81
  %1312 = vmatprep.subr.mxu0 %v78
  %1313 = vmatpush1.msra.mxu0 %v77
  %1314 = vmatprep.subr.mxu0 %v74
  %1315 = vmatpush1.msra.mxu0 %v73
  %1316 = vmatprep.subr.mxu0 %v70
  %1317 = vmatpush1.msra.mxu0 %v69
  %1318 = vmatprep.subr.mxu0 %v66
  %1319 = vmatpush1.msra.mxu0 %v65
  %1320 = vmatprep.subr.mxu0 %v62
  %1321 = vmatpush1.msra.mxu0 %v61
  %1322 = vmatprep.subr.mxu0 %v58
  %1323 = vmatpush1.msra.mxu0 %v57
  %1324 = vmatprep.subr.mxu0 %v54
  %1325 = vmatpush1.msra.mxu0 %v53
  %1326 = vmatprep.subr.mxu0 %v50
  %1327 = vmatpush1.msra.mxu0 %v49
  %1328 = vmatprep.subr.mxu0 %v46
  %1329 = vmatpush1.msra.mxu0 %v45
  %1330 = vmatprep.subr.mxu0 %v42
  %1331 = vmatpush1.msra.mxu0 %v41
  %1332 = vmatprep.subr.mxu0 %v38
  %1333 = vmatpush1.msra.mxu0 %v37
  %1334 = vmatprep.subr.mxu0 %v34
  %1335 = vmatpush1.msra.mxu0 %v33
  %1336 = vmatprep.subr.mxu0 %v30
  %1337 = vmatpush1.msra.mxu0 %v29
  %1338 = vmatprep.subr.mxu0 %v26
  %1339 = vmatpush1.msra.mxu0 %v25
  %1340 = vmatprep.subr.mxu0 %v22
  %1341 = vmatpush1.msra.mxu0 %v21
  %1342 = vmatprep.subr.mxu0 0.0
  %1343 = vmatpush2.msra.mxu0 0.0
  %1344 = vmatprep.subr.mxu0 0.0
  %1345 = vmatpush2.msra.mxu0 0.0
  %1346 = vmatprep.subr.mxu0 0.0
  %1347 = vmatpush2.msra.mxu0 0.0
  %1348 = vmatprep.subr.mxu0 0.0
  %1349 = vmatpush2.msra.mxu0 0.0
  %1350 = vmatprep.subr.mxu0 0.0
  %1351 = vmatpush2.msra.mxu0 0.0
  %1352 = vmatprep.subr.mxu0 0.0
  %1353 = vmatpush2.msra.mxu0 0.0
  %1354 = vmatprep.subr.mxu0 0.0
  %1355 = vmatpush2.msra.mxu0 0.0
  %1356 = vmatprep.subr.mxu0 0.0
  %1357 = vmatpush2.msra.mxu0 0.0
  %1358 = vmatprep.subr.mxu0 0.0
  %1359 = vmatpush2.msra.mxu0 0.0
  %1360 = vmatprep.subr.mxu0 0.0
  %1361 = vmatpush2.msra.mxu0 0.0
  %1362 = vmatprep.subr.mxu0 0.0
  %1363 = vmatpush2.msra.mxu0 0.0
  %1364 = vmatprep.subr.mxu0 0.0
  %1365 = vmatpush2.msra.mxu0 0.0
  %1366 = vmatprep.subr.mxu0 0.0
  %1367 = vmatpush2.msra.mxu0 0.0
  %1368 = vmatprep.subr.mxu0 0.0
  %1369 = vmatpush2.msra.mxu0 0.0
  %1370 = vmatprep.subr.mxu0 0.0
  %1371 = vmatpush2.msra.mxu0 0.0
  %1372 = vmatprep.subr.mxu0 0.0
  %1373 = vmatpush2.msra.mxu0 0.0
  %1374 = vmatprep.mubr.f32.mxu0 0.0
  %1375 = vmatmul.mubr.f32.gmra.mxu0 %v1304
  %v1376 = vpop.f32.mrf.mxu0
  %v1377 = vadd.f32 0.0, %v1376
  %v1378 = vpop.f32.mrf.mxu0
  %v1379 = vadd.f32 0.0, %v1378
  %1380 = vdwg.mxu0
  %1381 = vmatprep.subr.mxu0 %v84
  %1382 = vmatpush1.msra.mxu0 %v83
  %1383 = vmatprep.subr.mxu0 %v80
  %1384 = vmatpush1.msra.mxu0 %v79
  %1385 = vmatprep.subr.mxu0 %v76
  %1386 = vmatpush1.msra.mxu0 %v75
  %1387 = vmatprep.subr.mxu0 %v72
  %1388 = vmatpush1.msra.mxu0 %v71
  %1389 = vmatprep.subr.mxu0 %v68
  %1390 = vmatpush1.msra.mxu0 %v67
  %1391 = vmatprep.subr.mxu0 %v64
  %1392 = vmatpush1.msra.mxu0 %v63
  %1393 = vmatprep.subr.mxu0 %v60
  %1394 = vmatpush1.msra.mxu0 %v59
  %1395 = vmatprep.subr.mxu0 %v56
  %1396 = vmatpush1.msra.mxu0 %v55
  %1397 = vmatprep.subr.mxu0 %v52
  %1398 = vmatpush1.msra.mxu0 %v51
  %1399 = vmatprep.subr.mxu0 %v48
  %1400 = vmatpush1.msra.mxu0 %v47
  %1401 = vmatprep.subr.mxu0 %v44
  %1402 = vmatpush1.msra.mxu0 %v43
  %1403 = vmatprep.subr.mxu0 %v40
  %1404 = vmatpush1.msra.mxu0 %v39
  %1405 = vmatprep.subr.mxu0 %v36
  %1406 = vmatpush1.msra.mxu0 %v35
  %1407 = vmatprep.subr.mxu0 %v32
  %1408 = vmatpush1.msra.mxu0 %v31
  %1409 = vmatprep.subr.mxu0 %v28
  %1410 = vmatpush1.msra.mxu0 %v27
  %1411 = vmatprep.subr.mxu0 %v24
  %1412 = vmatpush1.msra.mxu0 %v23
  %1413 = vmatprep.subr.mxu0 0.0
  %1414 = vmatpush2.msra.mxu0 0.0
  %1415 = vmatprep.subr.mxu0 0.0
  %1416 = vmatpush2.msra.mxu0 0.0
  %1417 = vmatprep.subr.mxu0 0.0
  %1418 = vmatpush2.msra.mxu0 0.0
  %1419 = vmatprep.subr.mxu0 0.0
  %1420 = vmatpush2.msra.mxu0 0.0
  %1421 = vmatprep.subr.mxu0 0.0
  %1422 = vmatpush2.msra.mxu0 0.0
  %1423 = vmatprep.subr.mxu0 0.0
  %1424 = vmatpush2.msra.mxu0 0.0
  %1425 = vmatprep.subr.mxu0 0.0
  %1426 = vmatpush2.msra.mxu0 0.0
  %1427 = vmatprep.subr.mxu0 0.0
  %1428 = vmatpush2.msra.mxu0 0.0
  %1429 = vmatprep.subr.mxu0 0.0
  %1430 = vmatpush2.msra.mxu0 0.0
  %1431 = vmatprep.subr.mxu0 0.0
  %1432 = vmatpush2.msra.mxu0 0.0
  %1433 = vmatprep.subr.mxu0 0.0
  %1434 = vmatpush2.msra.mxu0 0.0
  %1435 = vmatprep.subr.mxu0 0.0
  %1436 = vmatpush2.msra.mxu0 0.0
  %1437 = vmatprep.subr.mxu0 0.0
  %1438 = vmatpush2.msra.mxu0 0.0
  %1439 = vmatprep.subr.mxu0 0.0
  %1440 = vmatpush2.msra.mxu0 0.0
  %1441 = vmatprep.subr.mxu0 0.0
  %1442 = vmatpush2.msra.mxu0 0.0
  %1443 = vmatprep.subr.mxu0 0.0
  %1444 = vmatpush2.msra.mxu0 0.0
  %1445 = vmatprep.mubr.f32.mxu0 0.0
  %1446 = vmatmul.mubr.f32.gmra.mxu0 %v1304
  %v1447 = vpop.f32.mrf.mxu0
  %v1448 = vadd.f32 0.0, %v1447
  %v1449 = vpop.f32.mrf.mxu0
  %v1450 = vadd.f32 0.0, %v1449
  %1451 = vdwg.mxu0
  %v1452 = vadd.f32 %v1306, %v1377
  %v1453 = vadd.f32 %v1307, %v1379
  %v1454 = vadd.f32 %v1308, %v1448
  %v1455 = vadd.f32 %v1309, %v1450
  %v1456 = vxor.u32 %v1452, 2147483648
  %v1457 = vxor.u32 %v1453, 2147483648
  %v1458 = vxor.u32 %v1454, 2147483648
  %v1459 = vmul.f32 %v1456, 1.442695
  %v1460 = vpow.pop %v1459
  %v1461 = vmul.f32 %v1457, 1.442695
  %v1462 = vpow.pop %v1461
  %v1463 = vmul.f32 %v1458, 1.442695
  %v1464 = vpow.pop %v1463
  %v1465 = vadd.f32 %v1460, 1.0
  %v1466 = vadd.f32 %v1462, 1.0
  %v1467 = vadd.f32 %v1464, 1.0
  %v1468 = vrcp.pop %v1465
  %v1469 = vmul.f32 1.0, %v1468
  %v1470 = vrcp.pop %v1466
  %v1471 = vmul.f32 1.0, %v1470
  %v1472 = vrcp.pop %v1467
  %v1473 = vmul.f32 1.0, %v1472
  %v1474 = vtanh.pop %v1455
  %v1475 = vmul.f32 %v1471, %v1302
  %v1476 = vmul.f32 %v1469, %v1474
  %v1477 = vadd.f32 %v1475, %v1476
  %v1478 = vtanh.pop %v1477
  %v1479 = vmul.f32 %v1473, %v1478
  %v1480 = vld [vmem:[%s2] sm:$0xff]
  %v1481 = vld [vmem:[%s2 + $0x8] sm:$0xff]
  %v1482 = vld [vmem:[%s2 + $0x10] sm:$0xff]
  %v1483 = vld [vmem:[%s2 + $0x18] sm:$0xff]
  %v1484 = vld [vmem:[%s2 + $0x20] sm:$0xff]
  %v1485 = vld [vmem:[%s2 + $0x28] sm:$0xff]
  %v1486 = vld [vmem:[%s2 + $0x30] sm:$0xff]
  %v1487 = vld [vmem:[%s2 + $0x38] sm:$0xff]
  %v1488 = vld [vmem:[%s2 + $0x40] sm:$0xff]
  %v1489 = vld [vmem:[%s2 + $0x48] sm:$0xff]
  %v1490 = vld [vmem:[%s2 + $0x50] sm:$0xff]
  %v1491 = vld [vmem:[%s2 + $0x58] sm:$0xff]
  %v1492 = vld [vmem:[%s2 + $0x60] sm:$0xff]
  %v1493 = vld [vmem:[%s2 + $0x68] sm:$0xff]
  %v1494 = vld [vmem:[%s2 + $0x70] sm:$0xff]
  %v1495 = vld [vmem:[%s2 + $0x78] sm:$0xff]
  %v1496 = vld [vmem:[%s3] sm:$0x1]
  %v1498 = vlaneseq
  %v1499 = vshrl.u32 %v1498, 7
  %v1500 = vsub.s32 0, %v1499
  %v1501 = vrot.slane %v1496, %v1500
  %1503 = vmatprep.subr.mxu0 0.0
  %1504 = vmatpush1.msra.mxu0 %v1495
  %1505 = vmatprep.subr.mxu0 0.0
  %1506 = vmatpush1.msra.mxu0 %v1494
  %1507 = vmatprep.subr.mxu0 0.0
  %1508 = vmatpush1.msra.mxu0 %v1493
  %1509 = vmatprep.subr.mxu0 0.0
  %1510 = vmatpush1.msra.mxu0 %v1492
  %1511 = vmatprep.subr.mxu0 0.0
  %1512 = vmatpush1.msra.mxu0 %v1491
  %1513 = vmatprep.subr.mxu0 0.0
  %1514 = vmatpush1.msra.mxu0 %v1490
  %1515 = vmatprep.subr.mxu0 0.0
  %1516 = vmatpush1.msra.mxu0 %v1489
  %1517 = vmatprep.subr.mxu0 0.0
  %1518 = vmatpush1.msra.mxu0 %v1488
  %1519 = vmatprep.subr.mxu0 0.0
  %1520 = vmatpush1.msra.mxu0 %v1487
  %1521 = vmatprep.subr.mxu0 0.0
  %1522 = vmatpush1.msra.mxu0 %v1486
  %1523 = vmatprep.subr.mxu0 0.0
  %1524 = vmatpush1.msra.mxu0 %v1485
  %1525 = vmatprep.subr.mxu0 0.0
  %1526 = vmatpush1.msra.mxu0 %v1484
  %1527 = vmatprep.subr.mxu0 0.0
  %1528 = vmatpush1.msra.mxu0 %v1483
  %1529 = vmatprep.subr.mxu0 0.0
  %1530 = vmatpush1.msra.mxu0 %v1482
  %1531 = vmatprep.subr.mxu0 0.0
  %1532 = vmatpush1.msra.mxu0 %v1481
  %1533 = vmatprep.subr.mxu0 0.0
  %1534 = vmatpush1.msra.mxu0 %v1480
  %1535 = vmatprep.subr.mxu0 0.0
  %1536 = vmatpush2.msra.mxu0 0.0
  %1537 = vmatprep.subr.mxu0 0.0
  %1538 = vmatpush2.msra.mxu0 0.0
  %1539 = vmatprep.subr.mxu0 0.0
  %1540 = vmatpush2.msra.mxu0 0.0
  %1541 = vmatprep.subr.mxu0 0.0
  %1542 = vmatpush2.msra.mxu0 0.0
  %1543 = vmatprep.subr.mxu0 0.0
  %1544 = vmatpush2.msra.mxu0 0.0
  %1545 = vmatprep.subr.mxu0 0.0
  %1546 = vmatpush2.msra.mxu0 0.0
  %1547 = vmatprep.subr.mxu0 0.0
  %1548 = vmatpush2.msra.mxu0 0.0
  %1549 = vmatprep.subr.mxu0 0.0
  %1550 = vmatpush2.msra.mxu0 0.0
  %1551 = vmatprep.subr.mxu0 0.0
  %1552 = vmatpush2.msra.mxu0 0.0
  %1553 = vmatprep.subr.mxu0 0.0
  %1554 = vmatpush2.msra.mxu0 0.0
  %1555 = vmatprep.subr.mxu0 0.0
  %1556 = vmatpush2.msra.mxu0 0.0
  %1557 = vmatprep.subr.mxu0 0.0
  %1558 = vmatpush2.msra.mxu0 0.0
  %1559 = vmatprep.subr.mxu0 0.0
  %1560 = vmatpush2.msra.mxu0 0.0
  %1561 = vmatprep.subr.mxu0 0.0
  %1562 = vmatpush2.msra.mxu0 0.0
  %1563 = vmatprep.subr.mxu0 0.0
  %1564 = vmatpush2.msra.mxu0 0.0
  %1565 = vmatprep.subr.mxu0 0.0
  %1566 = vmatpush2.msra.mxu0 0.0
  %1567 = vmatprep.mubr.f32.mxu0 0.0
  %1568 = vmatmul.mubr.f32.gmra.mxu0 %v1479
  %v1569 = vpop.f32.mrf.mxu0
  %v1570 = vadd.f32 %v1501, %v1569
  %v1571 = vpop.f32.mrf.mxu0
  %1572 = vdwg.mxu0
  %1573 = vst [vmem:[%s4] sm:$0xff] %v1570
  // Predicated region
  $region18: #{lstm_forward.1} parent=0 // pred_check
    _
  $region19: #{lstm_forward.1} parent=0 // pred_check_branch
    %1575 = sbr.rel (0) target = $region21
  $region20: #{lstm_forward.1} parent=0 // pred_region
    _
  $region21: #{lstm_forward.1} parent=0 // pred_fallthru
    _
  // Predicated region
  $region22: #{lstm_forward.1} parent=0 // pred_check
    _
  $region23: #{lstm_forward.1} parent=0 // pred_check_branch
    %1577 = sbr.rel (0) target = $region25
  $region24: #{lstm_forward.1} parent=0 // pred_region
    _
  $region25: #{lstm_forward.1} parent=0 // pred_fallthru
    _

</llo_original>
